<compile_context>
chip_gen: v5e
topology: v5e:2x2
jax: 0.10.0
libtpu: 0.0.40
codegen_flags: <defaults>
</compile_context>

<pallas_src>
import functools

import jax
import jax.numpy as jnp
import numpy as np
from jax.experimental import pallas as pl
from jax.experimental.pallas import tpu as pltpu

CONVT_SIZE = 8          # channel multiplier (from wgan.py)
NEG_SLOPE = 0.01        # nn.LeakyReLU() default
PER_STEP_BATCH = 8      # samples per grid step (keeps grid >= 2 for v7x megacore)


# ----------------------------------------------------------------------------
# Fused Pallas kernel: conv1 -> conv2 -> conv3 (each + bias + LeakyReLU) -> linear
# One grid step processes PER_STEP_BATCH samples; all weights are VMEM-resident.
# ----------------------------------------------------------------------------
def _disc_fused_kernel(x_ref, m1_ref, r1_ref, b1_ref, m2_ref, r2_ref, b2_ref,
                       m3_ref, r3_ref, b3_ref, wl_ref, e_ref, bl_ref, o_ref):
    B, H, lanes_in = x_ref.shape

    def conv_lrelu(act, m_ref, r_ref, b_ref):
        # act: (B*Hin, Win*Cin).  MXU operands in bf16, accumulation in f32.
        a16 = act.astype(jnp.bfloat16)
        out = b_ref[...]                                   # (1, Wo*Cout) f32
        for kh in range(3):                                # static unroll
            # block-diag 0/1 row selection (vertical tap + zero padding)
            sel = jnp.dot(r_ref[kh], a16,
                          preferred_element_type=jnp.float32).astype(jnp.bfloat16)
            # horizontal gather + padding + weights folded into one matmul
            out = out + jnp.dot(sel, m_ref[kh],
                                preferred_element_type=jnp.float32)
        return jnp.where(out > 0, out, NEG_SLOPE * out)    # f32 LeakyReLU

    act = x_ref[...].reshape(B * H, lanes_in)              # (B*32, 96)  bf16
    act = conv_lrelu(act, m1_ref, r1_ref, b1_ref)          # (B*16, 128) f32
    act = conv_lrelu(act, m2_ref, r2_ref, b2_ref)          # (B*8,  128) f32
    act = conv_lrelu(act, m3_ref, r3_ref, b3_ref)          # (B*4,  128) f32

    # Final Linear as an f32 VPU epilogue: per-row dot with the batch-tiled
    # linear weights, then a 0/1 grouping matrix sums the 4 rows of each
    # sample and lands one lane per sample -> a single (1, B) row store.
    rs = jnp.sum(act * wl_ref[...], axis=1, keepdims=True)   # (B*4, 1)
    res = jnp.sum(rs * e_ref[...], axis=0, keepdims=True)    # (1, B)
    o_ref[0] = res + bl_ref[...]


def discriminator_forward(prep, x_nchw, batch_block=PER_STEP_BATCH):
    N, C, H, W = x_nchw.shape
    B = int(batch_block)
    G = pl.cdiv(N, B)
    Npad = G * B

    # Host-side glue: NCHW -> (row = h, lane = w*C + c) layout, bf16 for the
    # first matmul operand.  TODO(synk): skip this transpose if the producer
    # can hand us NHWC directly.
    x_mat = jnp.transpose(x_nchw, (0, 2, 3, 1)).reshape(N, H, W * C)
    x_mat = x_mat.astype(jnp.bfloat16)
    if Npad != N:
        x_mat = jnp.pad(x_mat, ((0, Npad - N), (0, 0), (0, 0)))

    def resident(arr):                 # constant operand: same block every step
        nd = arr.ndim
        return pl.BlockSpec(arr.shape, lambda n, _z=(0,) * nd: _z)

    weight_keys = ("m1", "r1", "b1", "m2", "r2", "b2",
                   "m3", "r3", "b3", "wl", "e", "bl")
    in_specs = [pl.BlockSpec((B, H, W * C), lambda n: (n, 0, 0))]
    operands = [x_mat]
    for k in weight_keys:
        in_specs.append(resident(prep[k]))
        operands.append(prep[k])

    out = pl.pallas_call(
        _disc_fused_kernel,
        out_shape=jax.ShapeDtypeStruct((G, 1, B), jnp.float32),
        grid=(G,),
        in_specs=in_specs,
        out_specs=pl.BlockSpec((1, 1, B), lambda n: (n, 0, 0)),
        compiler_params=pltpu.CompilerParams(dimension_semantics=("parallel",)),
    )(*operands)
    return out.reshape(Npad, 1)[:N]


# ----------------------------------------------------------------------------
# Host-side (one-time) weight preparation: fold im2col gather + padding into
# constant matmul operands (bf16), plus block-diag row-selection matrices for
# the per-step batch and the final-Linear epilogue constants.
# ----------------------------------------------------------------------------
def prepare_pallas_params(params, batch_block):
    c = CONVT_SIZE
    Bb = int(batch_block)
    layer_dims = [(3, c, 32), (c, 2 * c, 16), (2 * c, 4 * c, 8)]
    prep = {}
    for idx, (cin, cout, H) in enumerate(layer_dims, start=1):
        W = H
        w = np.asarray(params[f"w{idx}"], np.float32)          # (cout, cin, 3, 3)
        b = np.asarray(params[f"b{idx}"], np.float32)          # (cout,)
        Ho, Wo = H // 2, W // 2
        # M[kh]: (W*cin, Wo*cout) — horizontal gather (kw, pad=1) fused with weights
        M = np.zeros((3, W * cin, Wo * cout), np.float32)
        for kh in range(3):
            for kw in range(3):
                tap = w[:, :, kh, kw].T                        # (cin, cout)
                for wo in range(Wo):
                    wi = 2 * wo + kw - 1
                    if 0 <= wi < W:
                        M[kh, wi * cin:(wi + 1) * cin,
                              wo * cout:(wo + 1) * cout] += tap
        # R[kh]: (Ho, H) vertical stride-2 row selection (pad rows -> zero rows),
        # replicated block-diagonally over the per-step batch.
        R = np.zeros((3, Ho, H), np.float32)
        for kh in range(3):
            for ho in range(Ho):
                hi = 2 * ho + kh - 1
                if 0 <= hi < H:
                    R[kh, ho, hi] = 1.0
        Rb = np.stack([np.kron(np.eye(Bb, dtype=np.float32), R[kh])
                       for kh in range(3)])                    # (3, Bb*Ho, Bb*H)
        prep[f"m{idx}"] = jnp.asarray(M, dtype=jnp.bfloat16)
        prep[f"r{idx}"] = jnp.asarray(Rb, dtype=jnp.bfloat16)
        prep[f"b{idx}"] = jnp.asarray(np.tile(b, Wo)[None, :], dtype=jnp.float32)

    # Final Linear weights permuted from the NCHW .view(-1, 64*c) flatten order
    # to the kernel's (h, w*C + c) layout, then tiled over the per-step batch.
    wl = np.asarray(params["wl"], np.float32).reshape(4 * c, 4, 4)   # (ch, h, w)
    wl_hw = np.transpose(wl, (1, 2, 0)).reshape(4, 4 * 4 * c)        # (4, 128)  <- bug fix
    prep["wl"] = jnp.asarray(np.tile(wl_hw, (Bb, 1)), dtype=jnp.float32)      # (4*Bb, 128)
    prep["e"] = jnp.asarray(np.kron(np.eye(Bb, dtype=np.float32),
                                    np.ones((4, 1), np.float32)))             # (4*Bb, Bb)
    prep["bl"] = jnp.asarray(np.asarray(params["bl"], np.float32).reshape(1, 1))
    return prep


# ----------------------------------------------------------------------------
# Parameter init (matches the PyTorch module's shapes)
# ----------------------------------------------------------------------------
def init_params(key):
    ks = jax.random.split(key, 8)
    c = CONVT_SIZE

    def conv_init(kw_, kb_, cout, cin):
        bound = 1.0 / np.sqrt(cin * 9)
        w = jax.random.uniform(kw_, (cout, cin, 3, 3), jnp.float32, -bound, bound)
        b = jax.random.uniform(kb_, (cout,), jnp.float32, -bound, bound)
        return w, b

    w1, b1 = conv_init(ks[0], ks[1], c, 3)
    w2, b2 = conv_init(ks[2], ks[3], 2 * c, c)
    w3, b3 = conv_init(ks[4], ks[5], 4 * c, 2 * c)
    bound = 1.0 / np.sqrt(64 * c)
    wl = jax.random.uniform(ks[6], (64 * c, 1), jnp.float32, -bound, bound)
    bl = jax.random.uniform(ks[7], (1,), jnp.float32, -bound, bound)
    return dict(w1=w1, b1=b1, w2=w2, b2=b2, w3=w3, b3=b3, wl=wl, bl=bl)


# ----------------------------------------------------------------------------
# Pure-JAX reference (for correctness check)
# ----------------------------------------------------------------------------
def reference_forward(params, x):
    def conv(x, w, b):
        y = jax.lax.conv_general_dilated(
            x, w, window_strides=(2, 2), padding=((1, 1), (1, 1)),
            dimension_numbers=("NCHW", "OIHW", "NCHW"))
        y = y + b[None, :, None, None]
        return jnp.where(y > 0, y, NEG_SLOPE * y)

    out = conv(x, params["w1"], params["b1"])
    out = conv(out, params["w2"], params["b2"])
    out = conv(out, params["w3"], params["b3"])
    flat = out.reshape(out.shape[0], 64 * CONVT_SIZE)
    return flat @ params["wl"] + params["bl"]


if __name__ == "__main__":
    key = jax.random.PRNGKey(0)
    kp, kx = jax.random.split(key)
    params = init_params(kp)
    # Input must be 32x32: 32 -> 16 -> 8 -> 4 spatial, 4*CONVT_SIZE channels
    # => 64*CONVT_SIZE features for the final Linear, as in the PyTorch module.
    N = 16
    x = jax.random.normal(kx, (N, 3, 32, 32), jnp.float32)

    prep = prepare_pallas_params(params, PER_STEP_BATCH)
    fwd = jax.jit(discriminator_forward, static_argnames=("batch_block",))
    out = jax.block_until_ready(fwd(prep, x, batch_block=PER_STEP_BATCH))

    ref = jax.block_until_ready(reference_forward(params, x))
    assert out.shape == (N, 1), out.shape
    np.testing.assert_allclose(np.asarray(out), np.asarray(ref), rtol=1e-2, atol=1e-2)

    print("KERNEL_OK")
</pallas_src>

<mosaic_0001>
module attributes {stable_mosaic.version = 11 : i64} {
  func.func @_disc_fused_kernel(%arg0: i32, %arg1: memref<8x32x96xbf16, #tpu.memory_space<vmem>>, %arg2: memref<3x96x128xbf16, #tpu.memory_space<vmem>>, %arg3: memref<3x128x256xbf16, #tpu.memory_space<vmem>>, %arg4: memref<1x128xf32, #tpu.memory_space<vmem>>, %arg5: memref<3x128x128xbf16, #tpu.memory_space<vmem>>, %arg6: memref<3x64x128xbf16, #tpu.memory_space<vmem>>, %arg7: memref<1x128xf32, #tpu.memory_space<vmem>>, %arg8: memref<3x128x128xbf16, #tpu.memory_space<vmem>>, %arg9: memref<3x32x64xbf16, #tpu.memory_space<vmem>>, %arg10: memref<1x128xf32, #tpu.memory_space<vmem>>, %arg11: memref<32x128xf32, #tpu.memory_space<vmem>>, %arg12: memref<32x8xf32, #tpu.memory_space<vmem>>, %arg13: memref<1x1xf32, #tpu.memory_space<vmem>>, %arg14: memref<1x1x8xf32, #tpu.memory_space<vmem>>) attributes {dimension_semantics = [#tpu.dimension_semantics<parallel>], iteration_bounds = array<i64: 2>, scalar_prefetch = 0 : i64, scratch_operands = 0 : i64, tpu.core_type = #tpu.core_type<tc>, window_params = [{transform_indices = @transform_0, window_bounds = array<i64: 8, 32, 96>}, {pipeline_mode = #tpu.pipeline_mode<synchronous>, transform_indices = @transform_1, window_bounds = array<i64: 3, 96, 128>}, {pipeline_mode = #tpu.pipeline_mode<synchronous>, transform_indices = @transform_2, window_bounds = array<i64: 3, 128, 256>}, {pipeline_mode = #tpu.pipeline_mode<synchronous>, transform_indices = @transform_3, window_bounds = array<i64: 1, 128>}, {pipeline_mode = #tpu.pipeline_mode<synchronous>, transform_indices = @transform_4, window_bounds = array<i64: 3, 128, 128>}, {pipeline_mode = #tpu.pipeline_mode<synchronous>, transform_indices = @transform_5, window_bounds = array<i64: 3, 64, 128>}, {pipeline_mode = #tpu.pipeline_mode<synchronous>, transform_indices = @transform_6, window_bounds = array<i64: 1, 128>}, {pipeline_mode = #tpu.pipeline_mode<synchronous>, transform_indices = @transform_7, window_bounds = array<i64: 3, 128, 128>}, {pipeline_mode = #tpu.pipeline_mode<synchronous>, transform_indices = @transform_8, window_bounds = array<i64: 3, 32, 64>}, {pipeline_mode = #tpu.pipeline_mode<synchronous>, transform_indices = @transform_9, window_bounds = array<i64: 1, 128>}, {pipeline_mode = #tpu.pipeline_mode<synchronous>, transform_indices = @transform_10, window_bounds = array<i64: 32, 128>}, {pipeline_mode = #tpu.pipeline_mode<synchronous>, transform_indices = @transform_11, window_bounds = array<i64: 32, 8>}, {pipeline_mode = #tpu.pipeline_mode<synchronous>, transform_indices = @transform_12, window_bounds = array<i64: 1, 1>}, {transform_indices = @transform_13, window_bounds = array<i64: 1, 1, 8>}]} {
    %c0 = arith.constant 0 : index
    %c0_0 = arith.constant 0 : index
    %c0_1 = arith.constant 0 : index
    %0 = vector.load %arg1[%c0, %c0_0, %c0_1] : memref<8x32x96xbf16, #tpu.memory_space<vmem>>, vector<8x32x96xbf16>
    %1 = vector.shape_cast %0 : vector<8x32x96xbf16> to vector<256x96xbf16>
    %c0_2 = arith.constant 0 : index
    %c0_3 = arith.constant 0 : index
    %2 = vector.load %arg4[%c0_2, %c0_3] : memref<1x128xf32, #tpu.memory_space<vmem>>, vector<1x128xf32>
    %c0_4 = arith.constant 0 : index
    %c0_5 = arith.constant 0 : index
    %c0_6 = arith.constant 0 : index
    %3 = vector.load %arg3[%c0_4, %c0_5, %c0_6] : memref<3x128x256xbf16, #tpu.memory_space<vmem>>, vector<1x128x256xbf16>
    %4 = vector.shape_cast %3 : vector<1x128x256xbf16> to vector<128x256xbf16>
    %cst = arith.constant dense<0.000000e+00> : vector<128x96xf32>
    %5 = tpu.matmul %4, %1, %cst {dimension_numbers = #tpu.dot_dimension_numbers<[1], [0], [0], [1], [0, 0, 1, 1], [], []>} : vector<128x256xbf16>, vector<256x96xbf16>, vector<128x96xf32> -> vector<128x96xf32>
    %6 = arith.truncf %5 : vector<128x96xf32> to vector<128x96xbf16>
    %c0_7 = arith.constant 0 : index
    %c0_8 = arith.constant 0 : index
    %c0_9 = arith.constant 0 : index
    %7 = vector.load %arg2[%c0_7, %c0_8, %c0_9] : memref<3x96x128xbf16, #tpu.memory_space<vmem>>, vector<1x96x128xbf16>
    %8 = vector.shape_cast %7 : vector<1x96x128xbf16> to vector<96x128xbf16>
    %cst_10 = arith.constant dense<0.000000e+00> : vector<128x128xf32>
    %9 = tpu.matmul %6, %8, %cst_10 {dimension_numbers = #tpu.dot_dimension_numbers<[1], [0], [0], [1], [0, 0, 1, 1], [], []>} : vector<128x96xbf16>, vector<96x128xbf16>, vector<128x128xf32> -> vector<128x128xf32>
    %10 = vector.broadcast %2 : vector<1x128xf32> to vector<128x128xf32>
    %11 = arith.addf %10, %9 : vector<128x128xf32>
    %c1 = arith.constant 1 : index
    %c0_11 = arith.constant 0 : index
    %c0_12 = arith.constant 0 : index
    %12 = vector.load %arg3[%c1, %c0_11, %c0_12] : memref<3x128x256xbf16, #tpu.memory_space<vmem>>, vector<1x128x256xbf16>
    %13 = vector.shape_cast %12 : vector<1x128x256xbf16> to vector<128x256xbf16>
    %cst_13 = arith.constant dense<0.000000e+00> : vector<128x96xf32>
    %14 = tpu.matmul %13, %1, %cst_13 {dimension_numbers = #tpu.dot_dimension_numbers<[1], [0], [0], [1], [0, 0, 1, 1], [], []>} : vector<128x256xbf16>, vector<256x96xbf16>, vector<128x96xf32> -> vector<128x96xf32>
    %15 = arith.truncf %14 : vector<128x96xf32> to vector<128x96xbf16>
    %c1_14 = arith.constant 1 : index
    %c0_15 = arith.constant 0 : index
    %c0_16 = arith.constant 0 : index
    %16 = vector.load %arg2[%c1_14, %c0_15, %c0_16] : memref<3x96x128xbf16, #tpu.memory_space<vmem>>, vector<1x96x128xbf16>
    %17 = vector.shape_cast %16 : vector<1x96x128xbf16> to vector<96x128xbf16>
    %cst_17 = arith.constant dense<0.000000e+00> : vector<128x128xf32>
    %18 = tpu.matmul %15, %17, %cst_17 {dimension_numbers = #tpu.dot_dimension_numbers<[1], [0], [0], [1], [0, 0, 1, 1], [], []>} : vector<128x96xbf16>, vector<96x128xbf16>, vector<128x128xf32> -> vector<128x128xf32>
    %19 = arith.addf %11, %18 : vector<128x128xf32>
    %c2 = arith.constant 2 : index
    %c0_18 = arith.constant 0 : index
    %c0_19 = arith.constant 0 : index
    %20 = vector.load %arg3[%c2, %c0_18, %c0_19] : memref<3x128x256xbf16, #tpu.memory_space<vmem>>, vector<1x128x256xbf16>
    %21 = vector.shape_cast %20 : vector<1x128x256xbf16> to vector<128x256xbf16>
    %cst_20 = arith.constant dense<0.000000e+00> : vector<128x96xf32>
    %22 = tpu.matmul %21, %1, %cst_20 {dimension_numbers = #tpu.dot_dimension_numbers<[1], [0], [0], [1], [0, 0, 1, 1], [], []>} : vector<128x256xbf16>, vector<256x96xbf16>, vector<128x96xf32> -> vector<128x96xf32>
    %23 = arith.truncf %22 : vector<128x96xf32> to vector<128x96xbf16>
    %c2_21 = arith.constant 2 : index
    %c0_22 = arith.constant 0 : index
    %c0_23 = arith.constant 0 : index
    %24 = vector.load %arg2[%c2_21, %c0_22, %c0_23] : memref<3x96x128xbf16, #tpu.memory_space<vmem>>, vector<1x96x128xbf16>
    %25 = vector.shape_cast %24 : vector<1x96x128xbf16> to vector<96x128xbf16>
    %cst_24 = arith.constant dense<0.000000e+00> : vector<128x128xf32>
    %26 = tpu.matmul %23, %25, %cst_24 {dimension_numbers = #tpu.dot_dimension_numbers<[1], [0], [0], [1], [0, 0, 1, 1], [], []>} : vector<128x96xbf16>, vector<96x128xbf16>, vector<128x128xf32> -> vector<128x128xf32>
    %27 = arith.addf %19, %26 : vector<128x128xf32>
    %cst_25 = arith.constant 0.000000e+00 : f32
    %28 = vector.broadcast %cst_25 : f32 to vector<128x128xf32>
    %29 = arith.cmpf ogt, %27, %28 : vector<128x128xf32>
    %cst_26 = arith.constant 0.00999999977 : f32
    %30 = vector.broadcast %cst_26 : f32 to vector<128x128xf32>
    %31 = arith.mulf %30, %27 : vector<128x128xf32>
    %32 = arith.select %29, %27, %31 : vector<128x128xi1>, vector<128x128xf32>
    %33 = arith.truncf %32 : vector<128x128xf32> to vector<128x128xbf16>
    %c0_27 = arith.constant 0 : index
    %c0_28 = arith.constant 0 : index
    %34 = vector.load %arg7[%c0_27, %c0_28] : memref<1x128xf32, #tpu.memory_space<vmem>>, vector<1x128xf32>
    %c0_29 = arith.constant 0 : index
    %c0_30 = arith.constant 0 : index
    %c0_31 = arith.constant 0 : index
    %35 = vector.load %arg6[%c0_29, %c0_30, %c0_31] : memref<3x64x128xbf16, #tpu.memory_space<vmem>>, vector<1x64x128xbf16>
    %36 = vector.shape_cast %35 : vector<1x64x128xbf16> to vector<64x128xbf16>
    %cst_32 = arith.constant dense<0.000000e+00> : vector<64x128xf32>
    %37 = tpu.matmul %36, %33, %cst_32 {dimension_numbers = #tpu.dot_dimension_numbers<[1], [0], [0], [1], [0, 0, 1, 1], [], []>} : vector<64x128xbf16>, vector<128x128xbf16>, vector<64x128xf32> -> vector<64x128xf32>
    %38 = arith.truncf %37 : vector<64x128xf32> to vector<64x128xbf16>
    %c0_33 = arith.constant 0 : index
    %c0_34 = arith.constant 0 : index
    %c0_35 = arith.constant 0 : index
    %39 = vector.load %arg5[%c0_33, %c0_34, %c0_35] : memref<3x128x128xbf16, #tpu.memory_space<vmem>>, vector<1x128x128xbf16>
    %40 = vector.shape_cast %39 : vector<1x128x128xbf16> to vector<128x128xbf16>
    %cst_36 = arith.constant dense<0.000000e+00> : vector<64x128xf32>
    %41 = tpu.matmul %38, %40, %cst_36 {dimension_numbers = #tpu.dot_dimension_numbers<[1], [0], [0], [1], [0, 0, 1, 1], [], []>} : vector<64x128xbf16>, vector<128x128xbf16>, vector<64x128xf32> -> vector<64x128xf32>
    %42 = vector.broadcast %34 : vector<1x128xf32> to vector<64x128xf32>
    %43 = arith.addf %42, %41 : vector<64x128xf32>
    %c1_37 = arith.constant 1 : index
    %c0_38 = arith.constant 0 : index
    %c0_39 = arith.constant 0 : index
    %44 = vector.load %arg6[%c1_37, %c0_38, %c0_39] : memref<3x64x128xbf16, #tpu.memory_space<vmem>>, vector<1x64x128xbf16>
    %45 = vector.shape_cast %44 : vector<1x64x128xbf16> to vector<64x128xbf16>
    %cst_40 = arith.constant dense<0.000000e+00> : vector<64x128xf32>
    %46 = tpu.matmul %45, %33, %cst_40 {dimension_numbers = #tpu.dot_dimension_numbers<[1], [0], [0], [1], [0, 0, 1, 1], [], []>} : vector<64x128xbf16>, vector<128x128xbf16>, vector<64x128xf32> -> vector<64x128xf32>
    %47 = arith.truncf %46 : vector<64x128xf32> to vector<64x128xbf16>
    %c1_41 = arith.constant 1 : index
    %c0_42 = arith.constant 0 : index
    %c0_43 = arith.constant 0 : index
    %48 = vector.load %arg5[%c1_41, %c0_42, %c0_43] : memref<3x128x128xbf16, #tpu.memory_space<vmem>>, vector<1x128x128xbf16>
    %49 = vector.shape_cast %48 : vector<1x128x128xbf16> to vector<128x128xbf16>
    %cst_44 = arith.constant dense<0.000000e+00> : vector<64x128xf32>
    %50 = tpu.matmul %47, %49, %cst_44 {dimension_numbers = #tpu.dot_dimension_numbers<[1], [0], [0], [1], [0, 0, 1, 1], [], []>} : vector<64x128xbf16>, vector<128x128xbf16>, vector<64x128xf32> -> vector<64x128xf32>
    %51 = arith.addf %43, %50 : vector<64x128xf32>
    %c2_45 = arith.constant 2 : index
    %c0_46 = arith.constant 0 : index
    %c0_47 = arith.constant 0 : index
    %52 = vector.load %arg6[%c2_45, %c0_46, %c0_47] : memref<3x64x128xbf16, #tpu.memory_space<vmem>>, vector<1x64x128xbf16>
    %53 = vector.shape_cast %52 : vector<1x64x128xbf16> to vector<64x128xbf16>
    %cst_48 = arith.constant dense<0.000000e+00> : vector<64x128xf32>
    %54 = tpu.matmul %53, %33, %cst_48 {dimension_numbers = #tpu.dot_dimension_numbers<[1], [0], [0], [1], [0, 0, 1, 1], [], []>} : vector<64x128xbf16>, vector<128x128xbf16>, vector<64x128xf32> -> vector<64x128xf32>
    %55 = arith.truncf %54 : vector<64x128xf32> to vector<64x128xbf16>
    %c2_49 = arith.constant 2 : index
    %c0_50 = arith.constant 0 : index
    %c0_51 = arith.constant 0 : index
    %56 = vector.load %arg5[%c2_49, %c0_50, %c0_51] : memref<3x128x128xbf16, #tpu.memory_space<vmem>>, vector<1x128x128xbf16>
    %57 = vector.shape_cast %56 : vector<1x128x128xbf16> to vector<128x128xbf16>
    %cst_52 = arith.constant dense<0.000000e+00> : vector<64x128xf32>
    %58 = tpu.matmul %55, %57, %cst_52 {dimension_numbers = #tpu.dot_dimension_numbers<[1], [0], [0], [1], [0, 0, 1, 1], [], []>} : vector<64x128xbf16>, vector<128x128xbf16>, vector<64x128xf32> -> vector<64x128xf32>
    %59 = arith.addf %51, %58 : vector<64x128xf32>
    %cst_53 = arith.constant 0.000000e+00 : f32
    %60 = vector.broadcast %cst_53 : f32 to vector<64x128xf32>
    %61 = arith.cmpf ogt, %59, %60 : vector<64x128xf32>
    %cst_54 = arith.constant 0.00999999977 : f32
    %62 = vector.broadcast %cst_54 : f32 to vector<64x128xf32>
    %63 = arith.mulf %62, %59 : vector<64x128xf32>
    %64 = arith.select %61, %59, %63 : vector<64x128xi1>, vector<64x128xf32>
    %65 = arith.truncf %64 : vector<64x128xf32> to vector<64x128xbf16>
    %c0_55 = arith.constant 0 : index
    %c0_56 = arith.constant 0 : index
    %66 = vector.load %arg10[%c0_55, %c0_56] : memref<1x128xf32, #tpu.memory_space<vmem>>, vector<1x128xf32>
    %c0_57 = arith.constant 0 : index
    %c0_58 = arith.constant 0 : index
    %c0_59 = arith.constant 0 : index
    %67 = vector.load %arg9[%c0_57, %c0_58, %c0_59] : memref<3x32x64xbf16, #tpu.memory_space<vmem>>, vector<1x32x64xbf16>
    %68 = vector.shape_cast %67 : vector<1x32x64xbf16> to vector<32x64xbf16>
    %cst_60 = arith.constant dense<0.000000e+00> : vector<32x128xf32>
    %69 = tpu.matmul %68, %65, %cst_60 {dimension_numbers = #tpu.dot_dimension_numbers<[1], [0], [0], [1], [0, 0, 1, 1], [], []>} : vector<32x64xbf16>, vector<64x128xbf16>, vector<32x128xf32> -> vector<32x128xf32>
    %70 = arith.truncf %69 : vector<32x128xf32> to vector<32x128xbf16>
    %c0_61 = arith.constant 0 : index
    %c0_62 = arith.constant 0 : index
    %c0_63 = arith.constant 0 : index
    %71 = vector.load %arg8[%c0_61, %c0_62, %c0_63] : memref<3x128x128xbf16, #tpu.memory_space<vmem>>, vector<1x128x128xbf16>
    %72 = vector.shape_cast %71 : vector<1x128x128xbf16> to vector<128x128xbf16>
    %cst_64 = arith.constant dense<0.000000e+00> : vector<32x128xf32>
    %73 = tpu.matmul %70, %72, %cst_64 {dimension_numbers = #tpu.dot_dimension_numbers<[1], [0], [0], [1], [0, 0, 1, 1], [], []>} : vector<32x128xbf16>, vector<128x128xbf16>, vector<32x128xf32> -> vector<32x128xf32>
    %74 = vector.broadcast %66 : vector<1x128xf32> to vector<32x128xf32>
    %75 = arith.addf %74, %73 : vector<32x128xf32>
    %c1_65 = arith.constant 1 : index
    %c0_66 = arith.constant 0 : index
    %c0_67 = arith.constant 0 : index
    %76 = vector.load %arg9[%c1_65, %c0_66, %c0_67] : memref<3x32x64xbf16, #tpu.memory_space<vmem>>, vector<1x32x64xbf16>
    %77 = vector.shape_cast %76 : vector<1x32x64xbf16> to vector<32x64xbf16>
    %cst_68 = arith.constant dense<0.000000e+00> : vector<32x128xf32>
    %78 = tpu.matmul %77, %65, %cst_68 {dimension_numbers = #tpu.dot_dimension_numbers<[1], [0], [0], [1], [0, 0, 1, 1], [], []>} : vector<32x64xbf16>, vector<64x128xbf16>, vector<32x128xf32> -> vector<32x128xf32>
    %79 = arith.truncf %78 : vector<32x128xf32> to vector<32x128xbf16>
    %c1_69 = arith.constant 1 : index
    %c0_70 = arith.constant 0 : index
    %c0_71 = arith.constant 0 : index
    %80 = vector.load %arg8[%c1_69, %c0_70, %c0_71] : memref<3x128x128xbf16, #tpu.memory_space<vmem>>, vector<1x128x128xbf16>
    %81 = vector.shape_cast %80 : vector<1x128x128xbf16> to vector<128x128xbf16>
    %cst_72 = arith.constant dense<0.000000e+00> : vector<32x128xf32>
    %82 = tpu.matmul %79, %81, %cst_72 {dimension_numbers = #tpu.dot_dimension_numbers<[1], [0], [0], [1], [0, 0, 1, 1], [], []>} : vector<32x128xbf16>, vector<128x128xbf16>, vector<32x128xf32> -> vector<32x128xf32>
    %83 = arith.addf %75, %82 : vector<32x128xf32>
    %c2_73 = arith.constant 2 : index
    %c0_74 = arith.constant 0 : index
    %c0_75 = arith.constant 0 : index
    %84 = vector.load %arg9[%c2_73, %c0_74, %c0_75] : memref<3x32x64xbf16, #tpu.memory_space<vmem>>, vector<1x32x64xbf16>
    %85 = vector.shape_cast %84 : vector<1x32x64xbf16> to vector<32x64xbf16>
    %cst_76 = arith.constant dense<0.000000e+00> : vector<32x128xf32>
    %86 = tpu.matmul %85, %65, %cst_76 {dimension_numbers = #tpu.dot_dimension_numbers<[1], [0], [0], [1], [0, 0, 1, 1], [], []>} : vector<32x64xbf16>, vector<64x128xbf16>, vector<32x128xf32> -> vector<32x128xf32>
    %87 = arith.truncf %86 : vector<32x128xf32> to vector<32x128xbf16>
    %c2_77 = arith.constant 2 : index
    %c0_78 = arith.constant 0 : index
    %c0_79 = arith.constant 0 : index
    %88 = vector.load %arg8[%c2_77, %c0_78, %c0_79] : memref<3x128x128xbf16, #tpu.memory_space<vmem>>, vector<1x128x128xbf16>
    %89 = vector.shape_cast %88 : vector<1x128x128xbf16> to vector<128x128xbf16>
    %cst_80 = arith.constant dense<0.000000e+00> : vector<32x128xf32>
    %90 = tpu.matmul %87, %89, %cst_80 {dimension_numbers = #tpu.dot_dimension_numbers<[1], [0], [0], [1], [0, 0, 1, 1], [], []>} : vector<32x128xbf16>, vector<128x128xbf16>, vector<32x128xf32> -> vector<32x128xf32>
    %91 = arith.addf %83, %90 : vector<32x128xf32>
    %cst_81 = arith.constant 0.000000e+00 : f32
    %92 = vector.broadcast %cst_81 : f32 to vector<32x128xf32>
    %93 = arith.cmpf ogt, %91, %92 : vector<32x128xf32>
    %cst_82 = arith.constant 0.00999999977 : f32
    %94 = vector.broadcast %cst_82 : f32 to vector<32x128xf32>
    %95 = arith.mulf %94, %91 : vector<32x128xf32>
    %96 = arith.select %93, %91, %95 : vector<32x128xi1>, vector<32x128xf32>
    %c0_83 = arith.constant 0 : index
    %c0_84 = arith.constant 0 : index
    %97 = vector.load %arg11[%c0_83, %c0_84] : memref<32x128xf32, #tpu.memory_space<vmem>>, vector<32x128xf32>
    %98 = arith.mulf %96, %97 : vector<32x128xf32>
    %cst_85 = arith.constant dense<0.000000e+00> : vector<32xf32>
    %99 = vector.multi_reduction <add>, %98, %cst_85 [1] : vector<32x128xf32> to vector<32xf32>
    %100 = vector.shape_cast %99 : vector<32xf32> to vector<32x1xf32>
    %c0_86 = arith.constant 0 : index
    %c0_87 = arith.constant 0 : index
    %101 = vector.load %arg12[%c0_86, %c0_87] : memref<32x8xf32, #tpu.memory_space<vmem>>, vector<32x8xf32>
    %102 = vector.broadcast %100 : vector<32x1xf32> to vector<32x8xf32>
    %103 = arith.mulf %102, %101 : vector<32x8xf32>
    %cst_88 = arith.constant dense<0.000000e+00> : vector<8xf32>
    %104 = vector.multi_reduction <add>, %103, %cst_88 [0] : vector<32x8xf32> to vector<8xf32>
    %105 = vector.shape_cast %104 : vector<8xf32> to vector<1x8xf32>
    %c0_89 = arith.constant 0 : index
    %c0_90 = arith.constant 0 : index
    %106 = vector.load %arg13[%c0_89, %c0_90] : memref<1x1xf32, #tpu.memory_space<vmem>>, vector<1x1xf32>
    %107 = vector.broadcast %106 : vector<1x1xf32> to vector<1x8xf32>
    %108 = arith.addf %105, %107 : vector<1x8xf32>
    %c0_91 = arith.constant 0 : index
    %c0_92 = arith.constant 0 : index
    %c0_93 = arith.constant 0 : index
    %109 = vector.load %arg14[%c0_91, %c0_92, %c0_93] : memref<1x1x8xf32, #tpu.memory_space<vmem>>, vector<1x1x8xf32>
    %110 = vector.shape_cast %109 : vector<1x1x8xf32> to vector<1x8xf32>
    %111 = vector.shape_cast %108 : vector<1x8xf32> to vector<1x1x8xf32>
    tpu.vector_store %arg14[%c0_91, %c0_92, %c0_93], %111 {strides = array<i32>} : memref<1x1x8xf32, #tpu.memory_space<vmem>>, vector<1x1x8xf32>,
    return
  }
  func.func @transform_0(%arg0: i32) -> (i32, i32, i32) {
    %c0_i32 = arith.constant 0 : i32
    %c0_i32_0 = arith.constant 0 : i32
    %c0_i32_1 = arith.constant 0 : i32
    return %arg0, %c0_i32, %c0_i32_0 : i32, i32, i32
  }
  func.func @transform_1(%arg0: i32) -> (i32, i32, i32) {
    %c0_i32 = arith.constant 0 : i32
    %c0_i32_0 = arith.constant 0 : i32
    %c0_i32_1 = arith.constant 0 : i32
    %c0_i32_2 = arith.constant 0 : i32
    return %c0_i32, %c0_i32_0, %c0_i32_1 : i32, i32, i32
  }
  func.func @transform_2(%arg0: i32) -> (i32, i32, i32) {
    %c0_i32 = arith.constant 0 : i32
    %c0_i32_0 = arith.constant 0 : i32
    %c0_i32_1 = arith.constant 0 : i32
    %c0_i32_2 = arith.constant 0 : i32
    return %c0_i32, %c0_i32_0, %c0_i32_1 : i32, i32, i32
  }
  func.func @transform_3(%arg0: i32) -> (i32, i32) {
    %c0_i32 = arith.constant 0 : i32
    %c0_i32_0 = arith.constant 0 : i32
    %c0_i32_1 = arith.constant 0 : i32
    return %c0_i32, %c0_i32_0 : i32, i32
  }
  func.func @transform_4(%arg0: i32) -> (i32, i32, i32) {
    %c0_i32 = arith.constant 0 : i32
    %c0_i32_0 = arith.constant 0 : i32
    %c0_i32_1 = arith.constant 0 : i32
    %c0_i32_2 = arith.constant 0 : i32
    return %c0_i32, %c0_i32_0, %c0_i32_1 : i32, i32, i32
  }
  func.func @transform_5(%arg0: i32) -> (i32, i32, i32) {
    %c0_i32 = arith.constant 0 : i32
    %c0_i32_0 = arith.constant 0 : i32
    %c0_i32_1 = arith.constant 0 : i32
    %c0_i32_2 = arith.constant 0 : i32
    return %c0_i32, %c0_i32_0, %c0_i32_1 : i32, i32, i32
  }
  func.func @transform_6(%arg0: i32) -> (i32, i32) {
    %c0_i32 = arith.constant 0 : i32
    %c0_i32_0 = arith.constant 0 : i32
    %c0_i32_1 = arith.constant 0 : i32
    return %c0_i32, %c0_i32_0 : i32, i32
  }
  func.func @transform_7(%arg0: i32) -> (i32, i32, i32) {
    %c0_i32 = arith.constant 0 : i32
    %c0_i32_0 = arith.constant 0 : i32
    %c0_i32_1 = arith.constant 0 : i32
    %c0_i32_2 = arith.constant 0 : i32
    return %c0_i32, %c0_i32_0, %c0_i32_1 : i32, i32, i32
  }
  func.func @transform_8(%arg0: i32) -> (i32, i32, i32) {
    %c0_i32 = arith.constant 0 : i32
    %c0_i32_0 = arith.constant 0 : i32
    %c0_i32_1 = arith.constant 0 : i32
    %c0_i32_2 = arith.constant 0 : i32
    return %c0_i32, %c0_i32_0, %c0_i32_1 : i32, i32, i32
  }
  func.func @transform_9(%arg0: i32) -> (i32, i32) {
    %c0_i32 = arith.constant 0 : i32
    %c0_i32_0 = arith.constant 0 : i32
    %c0_i32_1 = arith.constant 0 : i32
    return %c0_i32, %c0_i32_0 : i32, i32
  }
  func.func @transform_10(%arg0: i32) -> (i32, i32) {
    %c0_i32 = arith.constant 0 : i32
    %c0_i32_0 = arith.constant 0 : i32
    %c0_i32_1 = arith.constant 0 : i32
    return %c0_i32, %c0_i32_0 : i32, i32
  }
  func.func @transform_11(%arg0: i32) -> (i32, i32) {
    %c0_i32 = arith.constant 0 : i32
    %c0_i32_0 = arith.constant 0 : i32
    %c0_i32_1 = arith.constant 0 : i32
    return %c0_i32, %c0_i32_0 : i32, i32
  }
  func.func @transform_12(%arg0: i32) -> (i32, i32) {
    %c0_i32 = arith.constant 0 : i32
    %c0_i32_0 = arith.constant 0 : i32
    %c0_i32_1 = arith.constant 0 : i32
    return %c0_i32, %c0_i32_0 : i32, i32
  }
  func.func @transform_13(%arg0: i32) -> (i32, i32, i32) {
    %c0_i32 = arith.constant 0 : i32
    %c0_i32_0 = arith.constant 0 : i32
    %c0_i32_1 = arith.constant 0 : i32
    return %arg0, %c0_i32, %c0_i32_0 : i32, i32, i32
  }
}

</mosaic_0001>

<llo_original>
// kernel: discriminator_forward.1
$region0: #{discriminator_forward.1}
  #allocation0 [shape = 'u32[]', space=smem, size = 0x4, offset = 0x4, fixed_abs, tag = 'smem constant byte address 0x4 - core index']
  #allocation1 [shape = 'u32[72,128]{1,0:T(1,128)}', space=vmem, size = 0x9000, scoped, tag = 'internal scratch']
  #allocation2 [shape = 'f32[1,1]{1,0:T(1,128)S(1)}', space=vmem, size = 0x200, scoped, tag = 'scoped memory for discriminator_forward.1']
  %s0 = inlined_call_operand.vmem [shape: bf16[16,32,96], index: 0, kind: input, shape index: {}]
  %s1 = inlined_call_operand.vmem [shape: bf16[3,96,128], index: 1, kind: input, shape index: {}]
  %s2 = inlined_call_operand.vmem [shape: bf16[3,128,256], index: 2, kind: input, shape index: {}]
  %s3 = inlined_call_operand.vmem [shape: f32[1,128], index: 3, kind: input, shape index: {}]
  %s4 = inlined_call_operand.vmem [shape: bf16[3,128,128], index: 4, kind: input, shape index: {}]
  %s5 = inlined_call_operand.vmem [shape: bf16[3,64,128], index: 5, kind: input, shape index: {}]
  %s6 = inlined_call_operand.vmem [shape: f32[1,128], index: 6, kind: input, shape index: {}]
  %s7 = inlined_call_operand.vmem [shape: bf16[3,128,128], index: 7, kind: input, shape index: {}]
  %s8 = inlined_call_operand.vmem [shape: bf16[3,32,64], index: 8, kind: input, shape index: {}]
  %s9 = inlined_call_operand.vmem [shape: f32[1,128], index: 9, kind: input, shape index: {}]
  %s10 = inlined_call_operand.vmem [shape: f32[32,128], index: 10, kind: input, shape index: {}]
  %s11 = inlined_call_operand.vmem [shape: f32[32,8], index: 11, kind: input, shape index: {}]
  %s12 = inlined_call_operand.<no memory space> [shape: f32[1,1], index: 12, kind: input, shape index: {}]
  %s13 = inlined_call_operand.vmem [shape: f32[2,1,8], index: 13, kind: output, shape index: {}]
  %s14 = sld [smem:[#allocation0]]
  $region85: #{discriminator_forward.1} parent=0
    _
  %s16 = ssub.s32 1, %s14
  %s17 = scalar_select 0, %s16, %s14
  %v18 = vstv %s12
  %19 = vst [vmem:[#allocation2] sm:$0x1] %v18
  loop: start=0, step=1, limit=4
  $region2: #{discriminator_forward.1} parent=0 // loop_pre_header
    _
  $region3: #{discriminator_forward.1} parent=0 // loop_header
    %s21 = sphi 0, %s25
    %p22 = scmp.ge.s32.totalorder %s21, 4
    %s31 = sphi 0, %s33
    %s34 = sphi 0, %s31
    %s35 = sphi 0, %s34
    %s51 = sphi 0, %s35
    %s55 = sphi 0, %s55
    %s57 = sphi 0, %s55
    %s58 = sphi 0, %s57
    %s72 = sphi 0, %s58
    %s76 = sphi 0, %s76
    %s78 = sphi 0, %s76
    %s79 = sphi 0, %s78
    %s93 = sphi 0, %s79
    %s97 = sphi 0, %s97
    %s99 = sphi 0, %s97
    %s100 = sphi 0, %s99
    %s114 = sphi 0, %s100
    %s118 = sphi 0, %s118
    %s120 = sphi 0, %s118
    %s121 = sphi 0, %s120
    %s135 = sphi 0, %s121
    %s139 = sphi 0, %s139
    %s141 = sphi 0, %s139
    %s142 = sphi 0, %s141
    %s156 = sphi 0, %s142
    %s160 = sphi 0, %s160
    %s162 = sphi 0, %s160
    %s163 = sphi 0, %s162
    %s177 = sphi 0, %s163
    %s181 = sphi 0, %s181
    %s183 = sphi 0, %s181
    %s184 = sphi 0, %s183
    %s198 = sphi 0, %s184
    %s202 = sphi 0, %s202
    %s204 = sphi 0, %s202
    %s205 = sphi 0, %s204
    %s219 = sphi 0, %s205
    %s223 = sphi 0, %s223
    %s225 = sphi 0, %s223
    %s226 = sphi 0, %s225
    %s240 = sphi 0, %s226
    %s244 = sphi 0, %s244
    %s246 = sphi 0, %s244
    %s247 = sphi 0, %s246
    %s261 = sphi 0, %s247
    %s265 = sphi 0, %s265
    %s267 = sphi 0, %s265
    %s268 = sphi 0, %s267
    %s282 = sphi 0, %s268
    %s286 = sphi 0, %s286
    %s288 = sphi 0, %s286
    %s289 = sphi 0, %s288
    %s303 = sphi 0, %s289
    %s309 = sphi 0, %s311
    %s312 = sphi 0, %s309
    %s313 = sphi 0, %s312
    %s329 = sphi 0, %s313
  $region4: #{discriminator_forward.1} parent=0 // loop_header_branch
    %24 = sbr.rel (%p22) target = $region8
  $region5: #{discriminator_forward.1} parent=0 // loop_body
    %s26 = ssub.s32 %s21, 1
    %s27 = ssub.s32 %s21, 2
    %s28 = sadd.s32 %s21, 1
    %s29 = ssub.s32 %s21, %s28
    %p30 = scmp.eq.s32.totalorder %s29, 0
    %s32 = sadd.s32 %s31, 1
    %s33 = scalar_select %p30, %s31, %s32
    %p36 = pneg %p30
    %p37 = scmp.eq.s32.totalorder %s21, 1
    %p38 = por %p36, %p37
    %p39 = scmp.ne.s32.totalorder %s31, %s34
    %p40 = scmp.eq.s32.totalorder %s21, 0
    %p41 = por %p39, %p40
    %p42 = scmp.ne.s32.totalorder %s31, %s34
    %p43 = scmp.eq.s32.totalorder %s26, 1
    %p44 = por %p42, %p43
    %p45 = scmp.ne.s32.totalorder %s34, %s35
    %p46 = scmp.eq.s32.totalorder %s26, 0
    %p47 = por %p45, %p46
    %p48 = scmp.ne.s32.totalorder %s34, %s35
    %p49 = scmp.eq.s32.totalorder %s27, 1
    %p50 = por %p48, %p49
    %p52 = scmp.ne.s32.totalorder %s35, %s51
    %p53 = scmp.eq.s32.totalorder %s27, 0
    %p54 = por %p52, %p53
    %s56 = sadd.s32 %s55, 1
    %p59 = scmp.eq.s32.totalorder %s21, 1
    %p60 = scmp.ne.s32.totalorder %s55, %s57
    %p61 = scmp.eq.s32.totalorder %s21, 0
    %p62 = por %p60, %p61
    %p63 = scmp.ne.s32.totalorder %s55, %s57
    %p64 = scmp.eq.s32.totalorder %s26, 1
    %p65 = por %p63, %p64
    %p66 = scmp.ne.s32.totalorder %s57, %s58
    %p67 = scmp.eq.s32.totalorder %s26, 0
    %p68 = por %p66, %p67
    %p69 = scmp.ne.s32.totalorder %s57, %s58
    %p70 = scmp.eq.s32.totalorder %s27, 1
    %p71 = por %p69, %p70
    %p73 = scmp.ne.s32.totalorder %s58, %s72
    %p74 = scmp.eq.s32.totalorder %s27, 0
    %p75 = por %p73, %p74
    %s77 = sadd.s32 %s76, 1
    %p80 = scmp.eq.s32.totalorder %s21, 1
    %p81 = scmp.ne.s32.totalorder %s76, %s78
    %p82 = scmp.eq.s32.totalorder %s21, 0
    %p83 = por %p81, %p82
    %p84 = scmp.ne.s32.totalorder %s76, %s78
    %p85 = scmp.eq.s32.totalorder %s26, 1
    %p86 = por %p84, %p85
    %p87 = scmp.ne.s32.totalorder %s78, %s79
    %p88 = scmp.eq.s32.totalorder %s26, 0
    %p89 = por %p87, %p88
    %p90 = scmp.ne.s32.totalorder %s78, %s79
    %p91 = scmp.eq.s32.totalorder %s27, 1
    %p92 = por %p90, %p91
    %p94 = scmp.ne.s32.totalorder %s79, %s93
    %p95 = scmp.eq.s32.totalorder %s27, 0
    %p96 = por %p94, %p95
    %s98 = sadd.s32 %s97, 1
    %p101 = scmp.eq.s32.totalorder %s21, 1
    %p102 = scmp.ne.s32.totalorder %s97, %s99
    %p103 = scmp.eq.s32.totalorder %s21, 0
    %p104 = por %p102, %p103
    %p105 = scmp.ne.s32.totalorder %s97, %s99
    %p106 = scmp.eq.s32.totalorder %s26, 1
    %p107 = por %p105, %p106
    %p108 = scmp.ne.s32.totalorder %s99, %s100
    %p109 = scmp.eq.s32.totalorder %s26, 0
    %p110 = por %p108, %p109
    %p111 = scmp.ne.s32.totalorder %s99, %s100
    %p112 = scmp.eq.s32.totalorder %s27, 1
    %p113 = por %p111, %p112
    %p115 = scmp.ne.s32.totalorder %s100, %s114
    %p116 = scmp.eq.s32.totalorder %s27, 0
    %p117 = por %p115, %p116
    %s119 = sadd.s32 %s118, 1
    %p122 = scmp.eq.s32.totalorder %s21, 1
    %p123 = scmp.ne.s32.totalorder %s118, %s120
    %p124 = scmp.eq.s32.totalorder %s21, 0
    %p125 = por %p123, %p124
    %p126 = scmp.ne.s32.totalorder %s118, %s120
    %p127 = scmp.eq.s32.totalorder %s26, 1
    %p128 = por %p126, %p127
    %p129 = scmp.ne.s32.totalorder %s120, %s121
    %p130 = scmp.eq.s32.totalorder %s26, 0
    %p131 = por %p129, %p130
    %p132 = scmp.ne.s32.totalorder %s120, %s121
    %p133 = scmp.eq.s32.totalorder %s27, 1
    %p134 = por %p132, %p133
    %p136 = scmp.ne.s32.totalorder %s121, %s135
    %p137 = scmp.eq.s32.totalorder %s27, 0
    %p138 = por %p136, %p137
    %s140 = sadd.s32 %s139, 1
    %p143 = scmp.eq.s32.totalorder %s21, 1
    %p144 = scmp.ne.s32.totalorder %s139, %s141
    %p145 = scmp.eq.s32.totalorder %s21, 0
    %p146 = por %p144, %p145
    %p147 = scmp.ne.s32.totalorder %s139, %s141
    %p148 = scmp.eq.s32.totalorder %s26, 1
    %p149 = por %p147, %p148
    %p150 = scmp.ne.s32.totalorder %s141, %s142
    %p151 = scmp.eq.s32.totalorder %s26, 0
    %p152 = por %p150, %p151
    %p153 = scmp.ne.s32.totalorder %s141, %s142
    %p154 = scmp.eq.s32.totalorder %s27, 1
    %p155 = por %p153, %p154
    %p157 = scmp.ne.s32.totalorder %s142, %s156
    %p158 = scmp.eq.s32.totalorder %s27, 0
    %p159 = por %p157, %p158
    %s161 = sadd.s32 %s160, 1
    %p164 = scmp.eq.s32.totalorder %s21, 1
    %p165 = scmp.ne.s32.totalorder %s160, %s162
    %p166 = scmp.eq.s32.totalorder %s21, 0
    %p167 = por %p165, %p166
    %p168 = scmp.ne.s32.totalorder %s160, %s162
    %p169 = scmp.eq.s32.totalorder %s26, 1
    %p170 = por %p168, %p169
    %p171 = scmp.ne.s32.totalorder %s162, %s163
    %p172 = scmp.eq.s32.totalorder %s26, 0
    %p173 = por %p171, %p172
    %p174 = scmp.ne.s32.totalorder %s162, %s163
    %p175 = scmp.eq.s32.totalorder %s27, 1
    %p176 = por %p174, %p175
    %p178 = scmp.ne.s32.totalorder %s163, %s177
    %p179 = scmp.eq.s32.totalorder %s27, 0
    %p180 = por %p178, %p179
    %s182 = sadd.s32 %s181, 1
    %p185 = scmp.eq.s32.totalorder %s21, 1
    %p186 = scmp.ne.s32.totalorder %s181, %s183
    %p187 = scmp.eq.s32.totalorder %s21, 0
    %p188 = por %p186, %p187
    %p189 = scmp.ne.s32.totalorder %s181, %s183
    %p190 = scmp.eq.s32.totalorder %s26, 1
    %p191 = por %p189, %p190
    %p192 = scmp.ne.s32.totalorder %s183, %s184
    %p193 = scmp.eq.s32.totalorder %s26, 0
    %p194 = por %p192, %p193
    %p195 = scmp.ne.s32.totalorder %s183, %s184
    %p196 = scmp.eq.s32.totalorder %s27, 1
    %p197 = por %p195, %p196
    %p199 = scmp.ne.s32.totalorder %s184, %s198
    %p200 = scmp.eq.s32.totalorder %s27, 0
    %p201 = por %p199, %p200
    %s203 = sadd.s32 %s202, 1
    %p206 = scmp.eq.s32.totalorder %s21, 1
    %p207 = scmp.ne.s32.totalorder %s202, %s204
    %p208 = scmp.eq.s32.totalorder %s21, 0
    %p209 = por %p207, %p208
    %p210 = scmp.ne.s32.totalorder %s202, %s204
    %p211 = scmp.eq.s32.totalorder %s26, 1
    %p212 = por %p210, %p211
    %p213 = scmp.ne.s32.totalorder %s204, %s205
    %p214 = scmp.eq.s32.totalorder %s26, 0
    %p215 = por %p213, %p214
    %p216 = scmp.ne.s32.totalorder %s204, %s205
    %p217 = scmp.eq.s32.totalorder %s27, 1
    %p218 = por %p216, %p217
    %p220 = scmp.ne.s32.totalorder %s205, %s219
    %p221 = scmp.eq.s32.totalorder %s27, 0
    %p222 = por %p220, %p221
    %s224 = sadd.s32 %s223, 1
    %p227 = scmp.eq.s32.totalorder %s21, 1
    %p228 = scmp.ne.s32.totalorder %s223, %s225
    %p229 = scmp.eq.s32.totalorder %s21, 0
    %p230 = por %p228, %p229
    %p231 = scmp.ne.s32.totalorder %s223, %s225
    %p232 = scmp.eq.s32.totalorder %s26, 1
    %p233 = por %p231, %p232
    %p234 = scmp.ne.s32.totalorder %s225, %s226
    %p235 = scmp.eq.s32.totalorder %s26, 0
    %p236 = por %p234, %p235
    %p237 = scmp.ne.s32.totalorder %s225, %s226
    %p238 = scmp.eq.s32.totalorder %s27, 1
    %p239 = por %p237, %p238
    %p241 = scmp.ne.s32.totalorder %s226, %s240
    %p242 = scmp.eq.s32.totalorder %s27, 0
    %p243 = por %p241, %p242
    %s245 = sadd.s32 %s244, 1
    %p248 = scmp.eq.s32.totalorder %s21, 1
    %p249 = scmp.ne.s32.totalorder %s244, %s246
    %p250 = scmp.eq.s32.totalorder %s21, 0
    %p251 = por %p249, %p250
    %p252 = scmp.ne.s32.totalorder %s244, %s246
    %p253 = scmp.eq.s32.totalorder %s26, 1
    %p254 = por %p252, %p253
    %p255 = scmp.ne.s32.totalorder %s246, %s247
    %p256 = scmp.eq.s32.totalorder %s26, 0
    %p257 = por %p255, %p256
    %p258 = scmp.ne.s32.totalorder %s246, %s247
    %p259 = scmp.eq.s32.totalorder %s27, 1
    %p260 = por %p258, %p259
    %p262 = scmp.ne.s32.totalorder %s247, %s261
    %p263 = scmp.eq.s32.totalorder %s27, 0
    %p264 = por %p262, %p263
    %s266 = sadd.s32 %s265, 1
    %p269 = scmp.eq.s32.totalorder %s21, 1
    %p270 = scmp.ne.s32.totalorder %s265, %s267
    %p271 = scmp.eq.s32.totalorder %s21, 0
    %p272 = por %p270, %p271
    %p273 = scmp.ne.s32.totalorder %s265, %s267
    %p274 = scmp.eq.s32.totalorder %s26, 1
    %p275 = por %p273, %p274
    %p276 = scmp.ne.s32.totalorder %s267, %s268
    %p277 = scmp.eq.s32.totalorder %s26, 0
    %p278 = por %p276, %p277
    %p279 = scmp.ne.s32.totalorder %s267, %s268
    %p280 = scmp.eq.s32.totalorder %s27, 1
    %p281 = por %p279, %p280
    %p283 = scmp.ne.s32.totalorder %s268, %s282
    %p284 = scmp.eq.s32.totalorder %s27, 0
    %p285 = por %p283, %p284
    %s287 = sadd.s32 %s286, 1
    %p290 = scmp.eq.s32.totalorder %s21, 1
    %p291 = scmp.ne.s32.totalorder %s286, %s288
    %p292 = scmp.eq.s32.totalorder %s21, 0
    %p293 = por %p291, %p292
    %p294 = scmp.ne.s32.totalorder %s286, %s288
    %p295 = scmp.eq.s32.totalorder %s26, 1
    %p296 = por %p294, %p295
    %p297 = scmp.ne.s32.totalorder %s288, %s289
    %p298 = scmp.eq.s32.totalorder %s26, 0
    %p299 = por %p297, %p298
    %p300 = scmp.ne.s32.totalorder %s288, %s289
    %p301 = scmp.eq.s32.totalorder %s27, 1
    %p302 = por %p300, %p301
    %p304 = scmp.ne.s32.totalorder %s289, %s303
    %p305 = scmp.eq.s32.totalorder %s27, 0
    %p306 = por %p304, %p305
    %s307 = ssub.s32 %s21, %s28
    %p308 = scmp.eq.s32.totalorder %s307, 0
    %s310 = sadd.s32 %s309, 1
    %s311 = scalar_select %p308, %s309, %s310
    %p314 = pneg %p308
    %p315 = scmp.eq.s32.totalorder %s21, 1
    %p316 = por %p314, %p315
    %p317 = scmp.ne.s32.totalorder %s309, %s312
    %p318 = scmp.eq.s32.totalorder %s21, 0
    %p319 = por %p317, %p318
    %p320 = scmp.ne.s32.totalorder %s309, %s312
    %p321 = scmp.eq.s32.totalorder %s26, 1
    %p322 = por %p320, %p321
    %p323 = scmp.ne.s32.totalorder %s312, %s313
    %p324 = scmp.eq.s32.totalorder %s26, 0
    %p325 = por %p323, %p324
    %p326 = scmp.ne.s32.totalorder %s312, %s313
    %p327 = scmp.eq.s32.totalorder %s27, 1
    %p328 = por %p326, %p327
    %p330 = scmp.ne.s32.totalorder %s313, %s329
    %p331 = scmp.eq.s32.totalorder %s27, 0
    %p332 = por %p330, %p331
    %p333 = scmp.le.s32.totalorder 1, %s21
    %p334 = scmp.lt.s32.totalorder %s21, 3
    %p335 = pnand %p333, %p334
    %p336 = pneg %p335
    // Predicated region
    $region9: #{discriminator_forward.1} parent=5 // pred_check
      _
    $region10: #{discriminator_forward.1} parent=5 // pred_check_branch
      %338 = sbr.rel (%p335) target = $region12
    $region11: #{discriminator_forward.1} parent=5 // pred_region
      %s339 = ssub.s32 %s21, 1
      // Predicated region
      $region13: #{discriminator_forward.1} parent=11 // pred_check
        %p340 = pneg %p68
      $region14: #{discriminator_forward.1} parent=11 // pred_check_branch
        %342 = sbr.rel (%p340) target = $region16
      $region15: #{discriminator_forward.1} parent=11 // pred_region
        _
      $region16: #{discriminator_forward.1} parent=11 // pred_fallthru
        _
      // Predicated region
      $region17: #{discriminator_forward.1} parent=11 // pred_check
        %p343 = pneg %p89
      $region18: #{discriminator_forward.1} parent=11 // pred_check_branch
        %345 = sbr.rel (%p343) target = $region20
      $region19: #{discriminator_forward.1} parent=11 // pred_region
        _
      $region20: #{discriminator_forward.1} parent=11 // pred_fallthru
        _
      // Predicated region
      $region21: #{discriminator_forward.1} parent=11 // pred_check
        %p346 = pneg %p110
      $region22: #{discriminator_forward.1} parent=11 // pred_check_branch
        %348 = sbr.rel (%p346) target = $region24
      $region23: #{discriminator_forward.1} parent=11 // pred_region
        _
      $region24: #{discriminator_forward.1} parent=11 // pred_fallthru
        _
      // Predicated region
      $region25: #{discriminator_forward.1} parent=11 // pred_check
        %p349 = pneg %p131
      $region26: #{discriminator_forward.1} parent=11 // pred_check_branch
        %351 = sbr.rel (%p349) target = $region28
      $region27: #{discriminator_forward.1} parent=11 // pred_region
        _
      $region28: #{discriminator_forward.1} parent=11 // pred_fallthru
        _
      // Predicated region
      $region29: #{discriminator_forward.1} parent=11 // pred_check
        %p352 = pneg %p152
      $region30: #{discriminator_forward.1} parent=11 // pred_check_branch
        %354 = sbr.rel (%p352) target = $region32
      $region31: #{discriminator_forward.1} parent=11 // pred_region
        _
      $region32: #{discriminator_forward.1} parent=11 // pred_fallthru
        _
      // Predicated region
      $region33: #{discriminator_forward.1} parent=11 // pred_check
        %p355 = pneg %p173
      $region34: #{discriminator_forward.1} parent=11 // pred_check_branch
        %357 = sbr.rel (%p355) target = $region36
      $region35: #{discriminator_forward.1} parent=11 // pred_region
        _
      $region36: #{discriminator_forward.1} parent=11 // pred_fallthru
        _
      // Predicated region
      $region37: #{discriminator_forward.1} parent=11 // pred_check
        %p358 = pneg %p194
      $region38: #{discriminator_forward.1} parent=11 // pred_check_branch
        %360 = sbr.rel (%p358) target = $region40
      $region39: #{discriminator_forward.1} parent=11 // pred_region
        _
      $region40: #{discriminator_forward.1} parent=11 // pred_fallthru
        _
      // Predicated region
      $region41: #{discriminator_forward.1} parent=11 // pred_check
        %p361 = pneg %p215
      $region42: #{discriminator_forward.1} parent=11 // pred_check_branch
        %363 = sbr.rel (%p361) target = $region44
      $region43: #{discriminator_forward.1} parent=11 // pred_region
        _
      $region44: #{discriminator_forward.1} parent=11 // pred_fallthru
        _
      // Predicated region
      $region45: #{discriminator_forward.1} parent=11 // pred_check
        %p364 = pneg %p236
      $region46: #{discriminator_forward.1} parent=11 // pred_check_branch
        %366 = sbr.rel (%p364) target = $region48
      $region47: #{discriminator_forward.1} parent=11 // pred_region
        _
      $region48: #{discriminator_forward.1} parent=11 // pred_fallthru
        _
      // Predicated region
      $region49: #{discriminator_forward.1} parent=11 // pred_check
        %p367 = pneg %p257
      $region50: #{discriminator_forward.1} parent=11 // pred_check_branch
        %369 = sbr.rel (%p367) target = $region52
      $region51: #{discriminator_forward.1} parent=11 // pred_region
        _
      $region52: #{discriminator_forward.1} parent=11 // pred_fallthru
        _
      // Predicated region
      $region53: #{discriminator_forward.1} parent=11 // pred_check
        %p370 = pneg %p278
      $region54: #{discriminator_forward.1} parent=11 // pred_check_branch
        %372 = sbr.rel (%p370) target = $region56
      $region55: #{discriminator_forward.1} parent=11 // pred_region
        _
      $region56: #{discriminator_forward.1} parent=11 // pred_fallthru
        _
      // Predicated region
      $region57: #{discriminator_forward.1} parent=11 // pred_check
        %p373 = pneg %p299
      $region58: #{discriminator_forward.1} parent=11 // pred_check_branch
        %375 = sbr.rel (%p373) target = $region60
      $region59: #{discriminator_forward.1} parent=11 // pred_region
        _
      $region60: #{discriminator_forward.1} parent=11 // pred_fallthru
        _
    $region12: #{discriminator_forward.1} parent=5 // pred_fallthru
      _
    %p376 = scmp.lt.s32.totalorder %s21, 2
    // Predicated region
    $region61: #{discriminator_forward.1} parent=5 // pred_check
      %p377 = pneg %p376
    $region62: #{discriminator_forward.1} parent=5 // pred_check_branch
      %379 = sbr.rel (%p377) target = $region64
    $region63: #{discriminator_forward.1} parent=5 // pred_region
      // Predicated region
      $region65: #{discriminator_forward.1} parent=63 // pred_check
        %p380 = pneg %p41
      $region66: #{discriminator_forward.1} parent=63 // pred_check_branch
        %382 = sbr.rel (%p380) target = $region68
      $region67: #{discriminator_forward.1} parent=63 // pred_region
        %s383 = smul.u32 8, %s21
        %p384 = scmp.lt.s32.totalorder %s383, 15
        %s385 = scalar_select %p384, %s383, 15
        %s386 = smul.addr %s385, 4
        %s387 = smul.addr %s386, 4
        %s388 = scalar_lea.vmem %s0, %s387
        %s389 = smul.u32 8, %s21
      $region68: #{discriminator_forward.1} parent=63 // pred_fallthru
        _
    $region64: #{discriminator_forward.1} parent=5 // pred_fallthru
      _
    %p390 = scmp.le.s32.totalorder 1, %s21
    %p391 = scmp.lt.s32.totalorder %s21, 3
    %p392 = pnand %p390, %p391
    %p393 = pneg %p392
    // Predicated region
    $region69: #{discriminator_forward.1} parent=5 // pred_check
      _
    $region70: #{discriminator_forward.1} parent=5 // pred_check_branch
      %395 = sbr.rel (%p392) target = $region72
    $region71: #{discriminator_forward.1} parent=5 // pred_region
      %s396 = ssub.s32 %s21, 1
      %s397 = smul.u32 8, %s26
      %p398 = scmp.lt.s32.totalorder %s397, 15
      %s399 = scalar_select %p398, %s397, 15
      %s400 = smul.addr %s399, 4
      %s401 = smul.addr %s400, 4
      %s402 = scalar_lea.vmem %s0, %s401
      %p403 = pneg %p47
      %p404 = pneg %p44
      %p405 = pneg %p68
      %p406 = pneg %p65
      %p407 = pneg %p89
      %p408 = pneg %p86
      %p409 = pneg %p110
      %p410 = pneg %p107
      %p411 = pneg %p131
      %p412 = pneg %p128
      %p413 = pneg %p152
      %p414 = pneg %p149
      %p415 = pneg %p173
      %p416 = pneg %p170
      %p417 = pneg %p194
      %p418 = pneg %p191
      %p419 = pneg %p215
      %p420 = pneg %p212
      %p421 = pneg %p236
      %p422 = pneg %p233
      %p423 = pneg %p257
      %p424 = pneg %p254
      %p425 = pneg %p278
      %p426 = pneg %p275
      %p427 = pneg %p299
      %p428 = pneg %p296
      %p429 = pneg %p325
      %p430 = pneg %p322
      %p431 = scmp.lt.s32.totalorder %s26, 1
      %s432 = scalar_select %p431, %s26, 1
      %s433 = scalar_lea.vmem %s13, %s432
      %s434 = smul.u32 8, %s26
      %p435 = scmp.lt.s32.totalorder %s434, 15
      %s436 = scalar_select %p435, %s434, 15
      %s437 = smul.addr %s436, 4
      %s438 = smul.addr %s437, 4
      %s439 = scalar_lea.vmem %s0, %s438
      %s440 = smul.u32 8, %s26
      %p441 = scmp.lt.s32.totalorder %s26, 1
      %s442 = scalar_select %p441, %s26, 1
      %s443 = scalar_lea.vmem %s13, %s442
      %v445 = vld [vmem:[%s439] sm:$0xf]
      %v446 = vld [vmem:[%s439 + $0x4] sm:$0xf]
      %v447 = vld [vmem:[%s439 + $0x8] sm:$0xf]
      %v448 = vld [vmem:[%s439 + $0xc] sm:$0xf]
      %v449 = vld [vmem:[%s439 + $0x10] sm:$0xf]
      %v450 = vld [vmem:[%s439 + $0x14] sm:$0xf]
      %v451 = vld [vmem:[%s439 + $0x18] sm:$0xf]
      %v452 = vld [vmem:[%s439 + $0x1c] sm:$0xf]
      %v453 = vld [vmem:[%s439 + $0x20] sm:$0xf]
      %v454 = vld [vmem:[%s439 + $0x24] sm:$0xf]
      %v455 = vld [vmem:[%s439 + $0x28] sm:$0xf]
      %v456 = vld [vmem:[%s439 + $0x2c] sm:$0xf]
      %v457 = vld [vmem:[%s439 + $0x30] sm:$0xf]
      %v458 = vld [vmem:[%s439 + $0x34] sm:$0xf]
      %v459 = vld [vmem:[%s439 + $0x38] sm:$0xf]
      %v460 = vld [vmem:[%s439 + $0x3c] sm:$0xf]
      %v461 = vld [vmem:[%s439 + $0x40] sm:$0xf]
      %v462 = vld [vmem:[%s439 + $0x44] sm:$0xf]
      %v463 = vld [vmem:[%s439 + $0x48] sm:$0xf]
      %v464 = vld [vmem:[%s439 + $0x4c] sm:$0xf]
      %v465 = vld [vmem:[%s439 + $0x50] sm:$0xf]
      %v466 = vld [vmem:[%s439 + $0x54] sm:$0xf]
      %v467 = vld [vmem:[%s439 + $0x58] sm:$0xf]
      %v468 = vld [vmem:[%s439 + $0x5c] sm:$0xf]
      %v469 = vld [vmem:[%s439 + $0x60] sm:$0xf]
      %v470 = vld [vmem:[%s439 + $0x64] sm:$0xf]
      %v471 = vld [vmem:[%s439 + $0x68] sm:$0xf]
      %v472 = vld [vmem:[%s439 + $0x6c] sm:$0xf]
      %v473 = vld [vmem:[%s439 + $0x70] sm:$0xf]
      %v474 = vld [vmem:[%s439 + $0x74] sm:$0xf]
      %v475 = vld [vmem:[%s439 + $0x78] sm:$0xf]
      %v476 = vld [vmem:[%s439 + $0x7c] sm:$0xf]
      %v477 = vld [vmem:[%s3] sm:$0x1]
      %v478 = vld [vmem:[%s2] sm:$0xff]
      %v479 = vld [vmem:[%s2 + $0x8] sm:$0xff]
      %v480 = vld [vmem:[%s2 + $0x10] sm:$0xff]
      %v481 = vld [vmem:[%s2 + $0x18] sm:$0xff]
      %v482 = vld [vmem:[%s2 + $0x20] sm:$0xff]
      %v483 = vld [vmem:[%s2 + $0x28] sm:$0xff]
      %v484 = vld [vmem:[%s2 + $0x30] sm:$0xff]
      %v485 = vld [vmem:[%s2 + $0x38] sm:$0xff]
      %v486 = vld [vmem:[%s2 + $0x40] sm:$0xff]
      %v487 = vld [vmem:[%s2 + $0x48] sm:$0xff]
      %v488 = vld [vmem:[%s2 + $0x50] sm:$0xff]
      %v489 = vld [vmem:[%s2 + $0x58] sm:$0xff]
      %v490 = vld [vmem:[%s2 + $0x60] sm:$0xff]
      %v491 = vld [vmem:[%s2 + $0x68] sm:$0xff]
      %v492 = vld [vmem:[%s2 + $0x70] sm:$0xff]
      %v493 = vld [vmem:[%s2 + $0x78] sm:$0xff]
      %v510 = vunpack.c.l.b16 %v478
      %v511 = vunpack.c.h.b16 %v478
      %v512 = vunpack.c.l.b16 %v479
      %v513 = vunpack.c.h.b16 %v479
      %v514 = vunpack.c.l.b16 %v480
      %v515 = vunpack.c.h.b16 %v480
      %v516 = vunpack.c.l.b16 %v481
      %v517 = vunpack.c.h.b16 %v481
      %v518 = vunpack.c.l.b16 %v482
      %v519 = vunpack.c.h.b16 %v482
      %v520 = vunpack.c.l.b16 %v483
      %v521 = vunpack.c.h.b16 %v483
      %v522 = vunpack.c.l.b16 %v484
      %v523 = vunpack.c.h.b16 %v484
      %v524 = vunpack.c.l.b16 %v485
      %v525 = vunpack.c.h.b16 %v485
      %v526 = vunpack.c.l.b16 %v486
      %v527 = vunpack.c.h.b16 %v486
      %v528 = vunpack.c.l.b16 %v487
      %v529 = vunpack.c.h.b16 %v487
      %v530 = vunpack.c.l.b16 %v488
      %v531 = vunpack.c.h.b16 %v488
      %v532 = vunpack.c.l.b16 %v489
      %v533 = vunpack.c.h.b16 %v489
      %v534 = vunpack.c.l.b16 %v490
      %v535 = vunpack.c.h.b16 %v490
      %v536 = vunpack.c.l.b16 %v491
      %v537 = vunpack.c.h.b16 %v491
      %v538 = vunpack.c.l.b16 %v492
      %v539 = vunpack.c.h.b16 %v492
      %v540 = vunpack.c.l.b16 %v493
      %v541 = vunpack.c.h.b16 %v493
      %v542 = vpack.c.b16 %v512, %v510
      %v543 = vpack.c.b16 %v513, %v511
      %v544 = vpack.c.b16 %v516, %v514
      %v545 = vpack.c.b16 %v517, %v515
      %v546 = vpack.c.b16 %v520, %v518
      %v547 = vpack.c.b16 %v521, %v519
      %v548 = vpack.c.b16 %v524, %v522
      %v549 = vpack.c.b16 %v525, %v523
      %v550 = vpack.c.b16 %v528, %v526
      %v551 = vpack.c.b16 %v529, %v527
      %v552 = vpack.c.b16 %v532, %v530
      %v553 = vpack.c.b16 %v533, %v531
      %v554 = vpack.c.b16 %v536, %v534
      %v555 = vpack.c.b16 %v537, %v535
      %v556 = vpack.c.b16 %v540, %v538
      %v557 = vpack.c.b16 %v541, %v539
      %v606 = vunpack.c.l.b16 %v445
      %v607 = vunpack.c.l.b16 %v446
      %v608 = vunpack.c.l.b16 %v447
      %v609 = vunpack.c.l.b16 %v448
      %v610 = vunpack.c.l.b16 %v449
      %v611 = vunpack.c.l.b16 %v450
      %v612 = vunpack.c.l.b16 %v451
      %v613 = vunpack.c.l.b16 %v452
      %v614 = vunpack.c.l.b16 %v453
      %v615 = vunpack.c.l.b16 %v454
      %v616 = vunpack.c.l.b16 %v455
      %v617 = vunpack.c.l.b16 %v456
      %v618 = vunpack.c.l.b16 %v457
      %v619 = vunpack.c.l.b16 %v458
      %v620 = vunpack.c.l.b16 %v459
      %v621 = vunpack.c.l.b16 %v460
      %v622 = vunpack.c.l.b16 %v461
      %v623 = vunpack.c.l.b16 %v462
      %v624 = vunpack.c.l.b16 %v463
      %v625 = vunpack.c.l.b16 %v464
      %v626 = vunpack.c.l.b16 %v465
      %v627 = vunpack.c.l.b16 %v466
      %v628 = vunpack.c.l.b16 %v467
      %v629 = vunpack.c.l.b16 %v468
      %v630 = vunpack.c.l.b16 %v469
      %v631 = vunpack.c.l.b16 %v470
      %v632 = vunpack.c.l.b16 %v471
      %v633 = vunpack.c.l.b16 %v472
      %v634 = vunpack.c.l.b16 %v473
      %v635 = vunpack.c.l.b16 %v474
      %v636 = vunpack.c.l.b16 %v475
      %v637 = vunpack.c.l.b16 %v476
      %v638 = vpack.c.b16 %v607, %v606
      %v639 = vpack.c.b16 %v609, %v608
      %v640 = vpack.c.b16 %v611, %v610
      %v641 = vpack.c.b16 %v613, %v612
      %v642 = vpack.c.b16 %v615, %v614
      %v643 = vpack.c.b16 %v617, %v616
      %v644 = vpack.c.b16 %v619, %v618
      %v645 = vpack.c.b16 %v621, %v620
      %v646 = vpack.c.b16 %v623, %v622
      %v647 = vpack.c.b16 %v625, %v624
      %v648 = vpack.c.b16 %v627, %v626
      %v649 = vpack.c.b16 %v629, %v628
      %v650 = vpack.c.b16 %v631, %v630
      %v651 = vpack.c.b16 %v633, %v632
      %v652 = vpack.c.b16 %v635, %v634
      %v653 = vpack.c.b16 %v637, %v636
      %670 = vmatpush.bf16.msra.mxu0 %v645
      %671 = vmatpush.bf16.msra.mxu0 %v644
      %672 = vmatpush.bf16.msra.mxu0 %v643
      %673 = vmatpush.bf16.msra.mxu0 %v642
      %674 = vmatpush.bf16.msra.mxu0 %v641
      %675 = vmatpush.bf16.msra.mxu0 %v640
      %676 = vmatpush.bf16.msra.mxu0 %v639
      %677 = vmatpush.bf16.msra.mxu0 %v638
      %678 = vmatmul.bf16.gmra.mxu0 %v542
      %v679 = vpop.f32.mrf.mxu0
      %v680 = vadd.f32 0.0, %v679
      %v681 = vpop.f32.mrf.mxu0
      %v682 = vadd.f32 0.0, %v681
      %683 = vmatmul.bf16.gmra.mxu0 %v544
      %v684 = vpop.f32.mrf.mxu0
      %v685 = vadd.f32 0.0, %v684
      %v686 = vpop.f32.mrf.mxu0
      %v687 = vadd.f32 0.0, %v686
      %688 = vmatmul.bf16.gmra.mxu0 %v546
      %v689 = vpop.f32.mrf.mxu0
      %v690 = vadd.f32 0.0, %v689
      %v691 = vpop.f32.mrf.mxu0
      %v692 = vadd.f32 0.0, %v691
      %693 = vmatmul.bf16.gmra.mxu0 %v548
      %v694 = vpop.f32.mrf.mxu0
      %v695 = vadd.f32 0.0, %v694
      %v696 = vpop.f32.mrf.mxu0
      %v697 = vadd.f32 0.0, %v696
      %698 = vmatmul.bf16.gmra.mxu0 %v550
      %v699 = vpop.f32.mrf.mxu0
      %v700 = vadd.f32 0.0, %v699
      %v701 = vpop.f32.mrf.mxu0
      %v702 = vadd.f32 0.0, %v701
      %703 = vmatmul.bf16.gmra.mxu0 %v552
      %v704 = vpop.f32.mrf.mxu0
      %v705 = vadd.f32 0.0, %v704
      %v706 = vpop.f32.mrf.mxu0
      %v707 = vadd.f32 0.0, %v706
      %708 = vmatmul.bf16.gmra.mxu0 %v554
      %v709 = vpop.f32.mrf.mxu0
      %v710 = vadd.f32 0.0, %v709
      %v711 = vpop.f32.mrf.mxu0
      %v712 = vadd.f32 0.0, %v711
      %713 = vmatmul.bf16.gmra.mxu0 %v556
      %v714 = vpop.f32.mrf.mxu0
      %v715 = vadd.f32 0.0, %v714
      %v716 = vpop.f32.mrf.mxu0
      %v717 = vadd.f32 0.0, %v716
      %718 = vdwg.mxu0
      %719 = vmatpush.bf16.msra.mxu0 %v653
      %720 = vmatpush.bf16.msra.mxu0 %v652
      %721 = vmatpush.bf16.msra.mxu0 %v651
      %722 = vmatpush.bf16.msra.mxu0 %v650
      %723 = vmatpush.bf16.msra.mxu0 %v649
      %724 = vmatpush.bf16.msra.mxu0 %v648
      %725 = vmatpush.bf16.msra.mxu0 %v647
      %726 = vmatpush.bf16.msra.mxu0 %v646
      %727 = vmatmul.bf16.gmra.mxu0 %v543
      %v728 = vpop.f32.mrf.mxu0
      %v729 = vadd.f32 %v680, %v728
      %v730 = vpop.f32.mrf.mxu0
      %v731 = vadd.f32 %v682, %v730
      %732 = vmatmul.bf16.gmra.mxu0 %v545
      %v733 = vpop.f32.mrf.mxu0
      %v734 = vadd.f32 %v685, %v733
      %v735 = vpop.f32.mrf.mxu0
      %v736 = vadd.f32 %v687, %v735
      %737 = vmatmul.bf16.gmra.mxu0 %v547
      %v738 = vpop.f32.mrf.mxu0
      %v739 = vadd.f32 %v690, %v738
      %v740 = vpop.f32.mrf.mxu0
      %v741 = vadd.f32 %v692, %v740
      %742 = vmatmul.bf16.gmra.mxu0 %v549
      %v743 = vpop.f32.mrf.mxu0
      %v744 = vadd.f32 %v695, %v743
      %v745 = vpop.f32.mrf.mxu0
      %v746 = vadd.f32 %v697, %v745
      %747 = vmatmul.bf16.gmra.mxu0 %v551
      %v748 = vpop.f32.mrf.mxu0
      %v749 = vadd.f32 %v700, %v748
      %v750 = vpop.f32.mrf.mxu0
      %v751 = vadd.f32 %v702, %v750
      %752 = vmatmul.bf16.gmra.mxu0 %v553
      %v753 = vpop.f32.mrf.mxu0
      %v754 = vadd.f32 %v705, %v753
      %v755 = vpop.f32.mrf.mxu0
      %v756 = vadd.f32 %v707, %v755
      %757 = vmatmul.bf16.gmra.mxu0 %v555
      %v758 = vpop.f32.mrf.mxu0
      %v759 = vadd.f32 %v710, %v758
      %v760 = vpop.f32.mrf.mxu0
      %v761 = vadd.f32 %v712, %v760
      %762 = vmatmul.bf16.gmra.mxu0 %v557
      %v763 = vpop.f32.mrf.mxu0
      %v764 = vadd.f32 %v715, %v763
      %v765 = vpop.f32.mrf.mxu0
      %v766 = vadd.f32 %v717, %v765
      %767 = vdwg.mxu0
      %v768 = vpack.c.bf16 %v731, %v729
      %v769 = vpack.c.bf16 %v736, %v734
      %v770 = vpack.c.bf16 %v741, %v739
      %v771 = vpack.c.bf16 %v746, %v744
      %v772 = vpack.c.bf16 %v751, %v749
      %v773 = vpack.c.bf16 %v756, %v754
      %v774 = vpack.c.bf16 %v761, %v759
      %v775 = vpack.c.bf16 %v766, %v764
      %v776 = vld [vmem:[%s1] sm:$0xf]
      %v777 = vld [vmem:[%s1 + $0x4] sm:$0xf]
      %v778 = vld [vmem:[%s1 + $0x8] sm:$0xf]
      %v779 = vld [vmem:[%s1 + $0xc] sm:$0xf]
      %v780 = vld [vmem:[%s1 + $0x10] sm:$0xf]
      %v781 = vld [vmem:[%s1 + $0x14] sm:$0xf]
      %v782 = vld [vmem:[%s1 + $0x18] sm:$0xf]
      %v783 = vld [vmem:[%s1 + $0x1c] sm:$0xf]
      %v784 = vld [vmem:[%s1 + $0x20] sm:$0xf]
      %v785 = vld [vmem:[%s1 + $0x24] sm:$0xf]
      %v786 = vld [vmem:[%s1 + $0x28] sm:$0xf]
      %v787 = vld [vmem:[%s1 + $0x2c] sm:$0xf]
      %v800 = vunpack.c.l.b16 %v776
      %v801 = vunpack.c.l.b16 %v777
      %v802 = vunpack.c.l.b16 %v778
      %v803 = vunpack.c.l.b16 %v779
      %v804 = vunpack.c.l.b16 %v780
      %v805 = vunpack.c.l.b16 %v781
      %v806 = vunpack.c.l.b16 %v782
      %v807 = vunpack.c.l.b16 %v783
      %v808 = vunpack.c.l.b16 %v784
      %v809 = vunpack.c.l.b16 %v785
      %v810 = vunpack.c.l.b16 %v786
      %v811 = vunpack.c.l.b16 %v787
      %v812 = vpack.c.b16 %v801, %v800
      %v813 = vpack.c.b16 %v803, %v802
      %v814 = vpack.c.b16 %v805, %v804
      %v815 = vpack.c.b16 %v807, %v806
      %v816 = vpack.c.b16 %v809, %v808
      %v817 = vpack.c.b16 %v811, %v810
      %vm824 = vcmask 785408
      %v826 = vsel %vm824, %v768, 0
      %v829 = vsel %vm824, %v769, 0
      %v832 = vsel %vm824, %v770, 0
      %v835 = vsel %vm824, %v771, 0
      %v838 = vsel %vm824, %v772, 0
      %v841 = vsel %vm824, %v773, 0
      %v844 = vsel %vm824, %v774, 0
      %v847 = vsel %vm824, %v775, 0
      %849 = vmatpush.bf16.msra.mxu0 0
      %850 = vmatpush.bf16.msra.mxu0 0
      %851 = vmatpush.bf16.msra.mxu0 %v817
      %852 = vmatpush.bf16.msra.mxu0 %v816
      %853 = vmatpush.bf16.msra.mxu0 %v815
      %854 = vmatpush.bf16.msra.mxu0 %v814
      %855 = vmatpush.bf16.msra.mxu0 %v813
      %856 = vmatpush.bf16.msra.mxu0 %v812
      %857 = vmatmul.bf16.gmra.mxu0 %v826
      %v858 = vpop.f32.mrf.mxu0
      %v859 = vadd.f32 0.0, %v858
      %v860 = vpop.f32.mrf.mxu0
      %v861 = vadd.f32 0.0, %v860
      %862 = vmatmul.bf16.gmra.mxu0 %v829
      %v863 = vpop.f32.mrf.mxu0
      %v864 = vadd.f32 0.0, %v863
      %v865 = vpop.f32.mrf.mxu0
      %v866 = vadd.f32 0.0, %v865
      %867 = vmatmul.bf16.gmra.mxu0 %v832
      %v868 = vpop.f32.mrf.mxu0
      %v869 = vadd.f32 0.0, %v868
      %v870 = vpop.f32.mrf.mxu0
      %v871 = vadd.f32 0.0, %v870
      %872 = vmatmul.bf16.gmra.mxu0 %v835
      %v873 = vpop.f32.mrf.mxu0
      %v874 = vadd.f32 0.0, %v873
      %v875 = vpop.f32.mrf.mxu0
      %v876 = vadd.f32 0.0, %v875
      %877 = vmatmul.bf16.gmra.mxu0 %v838
      %v878 = vpop.f32.mrf.mxu0
      %v879 = vadd.f32 0.0, %v878
      %v880 = vpop.f32.mrf.mxu0
      %v881 = vadd.f32 0.0, %v880
      %882 = vmatmul.bf16.gmra.mxu0 %v841
      %v883 = vpop.f32.mrf.mxu0
      %v884 = vadd.f32 0.0, %v883
      %v885 = vpop.f32.mrf.mxu0
      %v886 = vadd.f32 0.0, %v885
      %887 = vmatmul.bf16.gmra.mxu0 %v844
      %v888 = vpop.f32.mrf.mxu0
      %v889 = vadd.f32 0.0, %v888
      %v890 = vpop.f32.mrf.mxu0
      %v891 = vadd.f32 0.0, %v890
      %892 = vmatmul.bf16.gmra.mxu0 %v847
      %v893 = vpop.f32.mrf.mxu0
      %v894 = vadd.f32 0.0, %v893
      %v895 = vpop.f32.mrf.mxu0
      %v896 = vadd.f32 0.0, %v895
      %897 = vdwg.mxu0
      %v899 = vperm.slane %v477, 0
      %v901 = vadd.f32 %v899, %v859
      %v902 = vadd.f32 %v899, %v861
      %v903 = vadd.f32 %v899, %v864
      %v904 = vadd.f32 %v899, %v866
      %v905 = vadd.f32 %v899, %v869
      %v906 = vadd.f32 %v899, %v871
      %v907 = vadd.f32 %v899, %v874
      %v908 = vadd.f32 %v899, %v876
      %v909 = vadd.f32 %v899, %v879
      %v910 = vadd.f32 %v899, %v881
      %v911 = vadd.f32 %v899, %v884
      %v912 = vadd.f32 %v899, %v886
      %v913 = vadd.f32 %v899, %v889
      %v914 = vadd.f32 %v899, %v891
      %v915 = vadd.f32 %v899, %v894
      %v916 = vadd.f32 %v899, %v896
      %s917 = scalar_lea.vmem %s2, 128
      %v918 = vld [vmem:[%s917] sm:$0xff]
      %v919 = vld [vmem:[%s917 + $0x8] sm:$0xff]
      %v920 = vld [vmem:[%s917 + $0x10] sm:$0xff]
      %v921 = vld [vmem:[%s917 + $0x18] sm:$0xff]
      %v922 = vld [vmem:[%s917 + $0x20] sm:$0xff]
      %v923 = vld [vmem:[%s917 + $0x28] sm:$0xff]
      %v924 = vld [vmem:[%s917 + $0x30] sm:$0xff]
      %v925 = vld [vmem:[%s917 + $0x38] sm:$0xff]
      %v926 = vld [vmem:[%s917 + $0x40] sm:$0xff]
      %v927 = vld [vmem:[%s917 + $0x48] sm:$0xff]
      %v928 = vld [vmem:[%s917 + $0x50] sm:$0xff]
      %v929 = vld [vmem:[%s917 + $0x58] sm:$0xff]
      %v930 = vld [vmem:[%s917 + $0x60] sm:$0xff]
      %v931 = vld [vmem:[%s917 + $0x68] sm:$0xff]
      %v932 = vld [vmem:[%s917 + $0x70] sm:$0xff]
      %v933 = vld [vmem:[%s917 + $0x78] sm:$0xff]
      %v950 = vunpack.c.l.b16 %v918
      %v951 = vunpack.c.h.b16 %v918
      %v952 = vunpack.c.l.b16 %v919
      %v953 = vunpack.c.h.b16 %v919
      %v954 = vunpack.c.l.b16 %v920
      %v955 = vunpack.c.h.b16 %v920
      %v956 = vunpack.c.l.b16 %v921
      %v957 = vunpack.c.h.b16 %v921
      %v958 = vunpack.c.l.b16 %v922
      %v959 = vunpack.c.h.b16 %v922
      %v960 = vunpack.c.l.b16 %v923
      %v961 = vunpack.c.h.b16 %v923
      %v962 = vunpack.c.l.b16 %v924
      %v963 = vunpack.c.h.b16 %v924
      %v964 = vunpack.c.l.b16 %v925
      %v965 = vunpack.c.h.b16 %v925
      %v966 = vunpack.c.l.b16 %v926
      %v967 = vunpack.c.h.b16 %v926
      %v968 = vunpack.c.l.b16 %v927
      %v969 = vunpack.c.h.b16 %v927
      %v970 = vunpack.c.l.b16 %v928
      %v971 = vunpack.c.h.b16 %v928
      %v972 = vunpack.c.l.b16 %v929
      %v973 = vunpack.c.h.b16 %v929
      %v974 = vunpack.c.l.b16 %v930
      %v975 = vunpack.c.h.b16 %v930
      %v976 = vunpack.c.l.b16 %v931
      %v977 = vunpack.c.h.b16 %v931
      %v978 = vunpack.c.l.b16 %v932
      %v979 = vunpack.c.h.b16 %v932
      %v980 = vunpack.c.l.b16 %v933
      %v981 = vunpack.c.h.b16 %v933
      %v982 = vpack.c.b16 %v952, %v950
      %v983 = vpack.c.b16 %v953, %v951
      %v984 = vpack.c.b16 %v956, %v954
      %v985 = vpack.c.b16 %v957, %v955
      %v986 = vpack.c.b16 %v960, %v958
      %v987 = vpack.c.b16 %v961, %v959
      %v988 = vpack.c.b16 %v964, %v962
      %v989 = vpack.c.b16 %v965, %v963
      %v990 = vpack.c.b16 %v968, %v966
      %v991 = vpack.c.b16 %v969, %v967
      %v992 = vpack.c.b16 %v972, %v970
      %v993 = vpack.c.b16 %v973, %v971
      %v994 = vpack.c.b16 %v976, %v974
      %v995 = vpack.c.b16 %v977, %v975
      %v996 = vpack.c.b16 %v980, %v978
      %v997 = vpack.c.b16 %v981, %v979
      %1014 = vmatpush.bf16.msra.mxu0 %v645
      %1015 = vmatpush.bf16.msra.mxu0 %v644
      %1016 = vmatpush.bf16.msra.mxu0 %v643
      %1017 = vmatpush.bf16.msra.mxu0 %v642
      %1018 = vmatpush.bf16.msra.mxu0 %v641
      %1019 = vmatpush.bf16.msra.mxu0 %v640
      %1020 = vmatpush.bf16.msra.mxu0 %v639
      %1021 = vmatpush.bf16.msra.mxu0 %v638
      %1022 = vmatmul.bf16.gmra.mxu0 %v982
      %v1023 = vpop.f32.mrf.mxu0
      %v1024 = vadd.f32 0.0, %v1023
      %v1025 = vpop.f32.mrf.mxu0
      %v1026 = vadd.f32 0.0, %v1025
      %1027 = vmatmul.bf16.gmra.mxu0 %v984
      %v1028 = vpop.f32.mrf.mxu0
      %v1029 = vadd.f32 0.0, %v1028
      %v1030 = vpop.f32.mrf.mxu0
      %v1031 = vadd.f32 0.0, %v1030
      %1032 = vmatmul.bf16.gmra.mxu0 %v986
      %v1033 = vpop.f32.mrf.mxu0
      %v1034 = vadd.f32 0.0, %v1033
      %v1035 = vpop.f32.mrf.mxu0
      %v1036 = vadd.f32 0.0, %v1035
      %1037 = vmatmul.bf16.gmra.mxu0 %v988
      %v1038 = vpop.f32.mrf.mxu0
      %v1039 = vadd.f32 0.0, %v1038
      %v1040 = vpop.f32.mrf.mxu0
      %v1041 = vadd.f32 0.0, %v1040
      %1042 = vmatmul.bf16.gmra.mxu0 %v990
      %v1043 = vpop.f32.mrf.mxu0
      %v1044 = vadd.f32 0.0, %v1043
      %v1045 = vpop.f32.mrf.mxu0
      %v1046 = vadd.f32 0.0, %v1045
      %1047 = vmatmul.bf16.gmra.mxu0 %v992
      %v1048 = vpop.f32.mrf.mxu0
      %v1049 = vadd.f32 0.0, %v1048
      %v1050 = vpop.f32.mrf.mxu0
      %v1051 = vadd.f32 0.0, %v1050
      %1052 = vmatmul.bf16.gmra.mxu0 %v994
      %v1053 = vpop.f32.mrf.mxu0
      %v1054 = vadd.f32 0.0, %v1053
      %v1055 = vpop.f32.mrf.mxu0
      %v1056 = vadd.f32 0.0, %v1055
      %1057 = vmatmul.bf16.gmra.mxu0 %v996
      %v1058 = vpop.f32.mrf.mxu0
      %v1059 = vadd.f32 0.0, %v1058
      %v1060 = vpop.f32.mrf.mxu0
      %v1061 = vadd.f32 0.0, %v1060
      %1062 = vdwg.mxu0
      %1063 = vmatpush.bf16.msra.mxu0 %v653
      %1064 = vmatpush.bf16.msra.mxu0 %v652
      %1065 = vmatpush.bf16.msra.mxu0 %v651
      %1066 = vmatpush.bf16.msra.mxu0 %v650
      %1067 = vmatpush.bf16.msra.mxu0 %v649
      %1068 = vmatpush.bf16.msra.mxu0 %v648
      %1069 = vmatpush.bf16.msra.mxu0 %v647
      %1070 = vmatpush.bf16.msra.mxu0 %v646
      %1071 = vmatmul.bf16.gmra.mxu0 %v983
      %v1072 = vpop.f32.mrf.mxu0
      %v1073 = vadd.f32 %v1024, %v1072
      %v1074 = vpop.f32.mrf.mxu0
      %v1075 = vadd.f32 %v1026, %v1074
      %1076 = vmatmul.bf16.gmra.mxu0 %v985
      %v1077 = vpop.f32.mrf.mxu0
      %v1078 = vadd.f32 %v1029, %v1077
      %v1079 = vpop.f32.mrf.mxu0
      %v1080 = vadd.f32 %v1031, %v1079
      %1081 = vmatmul.bf16.gmra.mxu0 %v987
      %v1082 = vpop.f32.mrf.mxu0
      %v1083 = vadd.f32 %v1034, %v1082
      %v1084 = vpop.f32.mrf.mxu0
      %v1085 = vadd.f32 %v1036, %v1084
      %1086 = vmatmul.bf16.gmra.mxu0 %v989
      %v1087 = vpop.f32.mrf.mxu0
      %v1088 = vadd.f32 %v1039, %v1087
      %v1089 = vpop.f32.mrf.mxu0
      %v1090 = vadd.f32 %v1041, %v1089
      %1091 = vmatmul.bf16.gmra.mxu0 %v991
      %v1092 = vpop.f32.mrf.mxu0
      %v1093 = vadd.f32 %v1044, %v1092
      %v1094 = vpop.f32.mrf.mxu0
      %v1095 = vadd.f32 %v1046, %v1094
      %1096 = vmatmul.bf16.gmra.mxu0 %v993
      %v1097 = vpop.f32.mrf.mxu0
      %v1098 = vadd.f32 %v1049, %v1097
      %v1099 = vpop.f32.mrf.mxu0
      %v1100 = vadd.f32 %v1051, %v1099
      %1101 = vmatmul.bf16.gmra.mxu0 %v995
      %v1102 = vpop.f32.mrf.mxu0
      %v1103 = vadd.f32 %v1054, %v1102
      %v1104 = vpop.f32.mrf.mxu0
      %v1105 = vadd.f32 %v1056, %v1104
      %1106 = vmatmul.bf16.gmra.mxu0 %v997
      %v1107 = vpop.f32.mrf.mxu0
      %v1108 = vadd.f32 %v1059, %v1107
      %v1109 = vpop.f32.mrf.mxu0
      %v1110 = vadd.f32 %v1061, %v1109
      %1111 = vdwg.mxu0
      %v1112 = vpack.c.bf16 %v1075, %v1073
      %v1113 = vpack.c.bf16 %v1080, %v1078
      %v1114 = vpack.c.bf16 %v1085, %v1083
      %v1115 = vpack.c.bf16 %v1090, %v1088
      %v1116 = vpack.c.bf16 %v1095, %v1093
      %v1117 = vpack.c.bf16 %v1100, %v1098
      %v1118 = vpack.c.bf16 %v1105, %v1103
      %v1119 = vpack.c.bf16 %v1110, %v1108
      %s1120 = scalar_lea.vmem %s1, 48
      %v1121 = vld [vmem:[%s1120] sm:$0xf]
      %v1122 = vld [vmem:[%s1120 + $0x4] sm:$0xf]
      %v1123 = vld [vmem:[%s1120 + $0x8] sm:$0xf]
      %v1124 = vld [vmem:[%s1120 + $0xc] sm:$0xf]
      %v1125 = vld [vmem:[%s1120 + $0x10] sm:$0xf]
      %v1126 = vld [vmem:[%s1120 + $0x14] sm:$0xf]
      %v1127 = vld [vmem:[%s1120 + $0x18] sm:$0xf]
      %v1128 = vld [vmem:[%s1120 + $0x1c] sm:$0xf]
      %v1129 = vld [vmem:[%s1120 + $0x20] sm:$0xf]
      %v1130 = vld [vmem:[%s1120 + $0x24] sm:$0xf]
      %v1131 = vld [vmem:[%s1120 + $0x28] sm:$0xf]
      %v1132 = vld [vmem:[%s1120 + $0x2c] sm:$0xf]
      %v1145 = vunpack.c.l.b16 %v1121
      %v1146 = vunpack.c.l.b16 %v1122
      %v1147 = vunpack.c.l.b16 %v1123
      %v1148 = vunpack.c.l.b16 %v1124
      %v1149 = vunpack.c.l.b16 %v1125
      %v1150 = vunpack.c.l.b16 %v1126
      %v1151 = vunpack.c.l.b16 %v1127
      %v1152 = vunpack.c.l.b16 %v1128
      %v1153 = vunpack.c.l.b16 %v1129
      %v1154 = vunpack.c.l.b16 %v1130
      %v1155 = vunpack.c.l.b16 %v1131
      %v1156 = vunpack.c.l.b16 %v1132
      %v1157 = vpack.c.b16 %v1146, %v1145
      %v1158 = vpack.c.b16 %v1148, %v1147
      %v1159 = vpack.c.b16 %v1150, %v1149
      %v1160 = vpack.c.b16 %v1152, %v1151
      %v1161 = vpack.c.b16 %v1154, %v1153
      %v1162 = vpack.c.b16 %v1156, %v1155
      %v1170 = vsel %vm824, %v1112, 0
      %v1173 = vsel %vm824, %v1113, 0
      %v1176 = vsel %vm824, %v1114, 0
      %v1179 = vsel %vm824, %v1115, 0
      %v1182 = vsel %vm824, %v1116, 0
      %v1185 = vsel %vm824, %v1117, 0
      %v1188 = vsel %vm824, %v1118, 0
      %v1191 = vsel %vm824, %v1119, 0
      %1193 = vmatpush.bf16.msra.mxu0 0
      %1194 = vmatpush.bf16.msra.mxu0 0
      %1195 = vmatpush.bf16.msra.mxu0 %v1162
      %1196 = vmatpush.bf16.msra.mxu0 %v1161
      %1197 = vmatpush.bf16.msra.mxu0 %v1160
      %1198 = vmatpush.bf16.msra.mxu0 %v1159
      %1199 = vmatpush.bf16.msra.mxu0 %v1158
      %1200 = vmatpush.bf16.msra.mxu0 %v1157
      %1201 = vmatmul.bf16.gmra.mxu0 %v1170
      %v1202 = vpop.f32.mrf.mxu0
      %v1203 = vadd.f32 0.0, %v1202
      %v1204 = vpop.f32.mrf.mxu0
      %v1205 = vadd.f32 0.0, %v1204
      %1206 = vmatmul.bf16.gmra.mxu0 %v1173
      %v1207 = vpop.f32.mrf.mxu0
      %v1208 = vadd.f32 0.0, %v1207
      %v1209 = vpop.f32.mrf.mxu0
      %v1210 = vadd.f32 0.0, %v1209
      %1211 = vmatmul.bf16.gmra.mxu0 %v1176
      %v1212 = vpop.f32.mrf.mxu0
      %v1213 = vadd.f32 0.0, %v1212
      %v1214 = vpop.f32.mrf.mxu0
      %v1215 = vadd.f32 0.0, %v1214
      %1216 = vmatmul.bf16.gmra.mxu0 %v1179
      %v1217 = vpop.f32.mrf.mxu0
      %v1218 = vadd.f32 0.0, %v1217
      %v1219 = vpop.f32.mrf.mxu0
      %v1220 = vadd.f32 0.0, %v1219
      %1221 = vmatmul.bf16.gmra.mxu0 %v1182
      %v1222 = vpop.f32.mrf.mxu0
      %v1223 = vadd.f32 0.0, %v1222
      %v1224 = vpop.f32.mrf.mxu0
      %v1225 = vadd.f32 0.0, %v1224
      %1226 = vmatmul.bf16.gmra.mxu0 %v1185
      %v1227 = vpop.f32.mrf.mxu0
      %v1228 = vadd.f32 0.0, %v1227
      %v1229 = vpop.f32.mrf.mxu0
      %v1230 = vadd.f32 0.0, %v1229
      %1231 = vmatmul.bf16.gmra.mxu0 %v1188
      %v1232 = vpop.f32.mrf.mxu0
      %v1233 = vadd.f32 0.0, %v1232
      %v1234 = vpop.f32.mrf.mxu0
      %v1235 = vadd.f32 0.0, %v1234
      %1236 = vmatmul.bf16.gmra.mxu0 %v1191
      %v1237 = vpop.f32.mrf.mxu0
      %v1238 = vadd.f32 0.0, %v1237
      %v1239 = vpop.f32.mrf.mxu0
      %v1240 = vadd.f32 0.0, %v1239
      %1241 = vdwg.mxu0
      %v1242 = vadd.f32 %v901, %v1203
      %v1243 = vadd.f32 %v902, %v1205
      %v1244 = vadd.f32 %v903, %v1208
      %v1245 = vadd.f32 %v904, %v1210
      %v1246 = vadd.f32 %v905, %v1213
      %v1247 = vadd.f32 %v906, %v1215
      %v1248 = vadd.f32 %v907, %v1218
      %v1249 = vadd.f32 %v908, %v1220
      %v1250 = vadd.f32 %v909, %v1223
      %v1251 = vadd.f32 %v910, %v1225
      %v1252 = vadd.f32 %v911, %v1228
      %v1253 = vadd.f32 %v912, %v1230
      %v1254 = vadd.f32 %v913, %v1233
      %v1255 = vadd.f32 %v914, %v1235
      %v1256 = vadd.f32 %v915, %v1238
      %v1257 = vadd.f32 %v916, %v1240
      %s1258 = scalar_lea.vmem %s2, 256
      %v1259 = vld [vmem:[%s1258] sm:$0xff]
      %v1260 = vld [vmem:[%s1258 + $0x8] sm:$0xff]
      %v1261 = vld [vmem:[%s1258 + $0x10] sm:$0xff]
      %v1262 = vld [vmem:[%s1258 + $0x18] sm:$0xff]
      %v1263 = vld [vmem:[%s1258 + $0x20] sm:$0xff]
      %v1264 = vld [vmem:[%s1258 + $0x28] sm:$0xff]
      %v1265 = vld [vmem:[%s1258 + $0x30] sm:$0xff]
      %v1266 = vld [vmem:[%s1258 + $0x38] sm:$0xff]
      %v1267 = vld [vmem:[%s1258 + $0x40] sm:$0xff]
      %v1268 = vld [vmem:[%s1258 + $0x48] sm:$0xff]
      %v1269 = vld [vmem:[%s1258 + $0x50] sm:$0xff]
      %v1270 = vld [vmem:[%s1258 + $0x58] sm:$0xff]
      %v1271 = vld [vmem:[%s1258 + $0x60] sm:$0xff]
      %v1272 = vld [vmem:[%s1258 + $0x68] sm:$0xff]
      %v1273 = vld [vmem:[%s1258 + $0x70] sm:$0xff]
      %v1274 = vld [vmem:[%s1258 + $0x78] sm:$0xff]
      %v1291 = vunpack.c.l.b16 %v1259
      %v1292 = vunpack.c.h.b16 %v1259
      %v1293 = vunpack.c.l.b16 %v1260
      %v1294 = vunpack.c.h.b16 %v1260
      %v1295 = vunpack.c.l.b16 %v1261
      %v1296 = vunpack.c.h.b16 %v1261
      %v1297 = vunpack.c.l.b16 %v1262
      %v1298 = vunpack.c.h.b16 %v1262
      %v1299 = vunpack.c.l.b16 %v1263
      %v1300 = vunpack.c.h.b16 %v1263
      %v1301 = vunpack.c.l.b16 %v1264
      %v1302 = vunpack.c.h.b16 %v1264
      %v1303 = vunpack.c.l.b16 %v1265
      %v1304 = vunpack.c.h.b16 %v1265
      %v1305 = vunpack.c.l.b16 %v1266
      %v1306 = vunpack.c.h.b16 %v1266
      %v1307 = vunpack.c.l.b16 %v1267
      %v1308 = vunpack.c.h.b16 %v1267
      %v1309 = vunpack.c.l.b16 %v1268
      %v1310 = vunpack.c.h.b16 %v1268
      %v1311 = vunpack.c.l.b16 %v1269
      %v1312 = vunpack.c.h.b16 %v1269
      %v1313 = vunpack.c.l.b16 %v1270
      %v1314 = vunpack.c.h.b16 %v1270
      %v1315 = vunpack.c.l.b16 %v1271
      %v1316 = vunpack.c.h.b16 %v1271
      %v1317 = vunpack.c.l.b16 %v1272
      %v1318 = vunpack.c.h.b16 %v1272
      %v1319 = vunpack.c.l.b16 %v1273
      %v1320 = vunpack.c.h.b16 %v1273
      %v1321 = vunpack.c.l.b16 %v1274
      %v1322 = vunpack.c.h.b16 %v1274
      %v1323 = vpack.c.b16 %v1293, %v1291
      %v1324 = vpack.c.b16 %v1294, %v1292
      %v1325 = vpack.c.b16 %v1297, %v1295
      %v1326 = vpack.c.b16 %v1298, %v1296
      %v1327 = vpack.c.b16 %v1301, %v1299
      %v1328 = vpack.c.b16 %v1302, %v1300
      %v1329 = vpack.c.b16 %v1305, %v1303
      %v1330 = vpack.c.b16 %v1306, %v1304
      %v1331 = vpack.c.b16 %v1309, %v1307
      %v1332 = vpack.c.b16 %v1310, %v1308
      %v1333 = vpack.c.b16 %v1313, %v1311
      %v1334 = vpack.c.b16 %v1314, %v1312
      %v1335 = vpack.c.b16 %v1317, %v1315
      %v1336 = vpack.c.b16 %v1318, %v1316
      %v1337 = vpack.c.b16 %v1321, %v1319
      %v1338 = vpack.c.b16 %v1322, %v1320
      %1355 = vmatpush.bf16.msra.mxu0 %v645
      %1356 = vmatpush.bf16.msra.mxu0 %v644
      %1357 = vmatpush.bf16.msra.mxu0 %v643
      %1358 = vmatpush.bf16.msra.mxu0 %v642
      %1359 = vmatpush.bf16.msra.mxu0 %v641
      %1360 = vmatpush.bf16.msra.mxu0 %v640
      %1361 = vmatpush.bf16.msra.mxu0 %v639
      %1362 = vmatpush.bf16.msra.mxu0 %v638
      %1363 = vmatmul.bf16.gmra.mxu0 %v1323
      %v1364 = vpop.f32.mrf.mxu0
      %v1365 = vadd.f32 0.0, %v1364
      %v1366 = vpop.f32.mrf.mxu0
      %v1367 = vadd.f32 0.0, %v1366
      %1368 = vmatmul.bf16.gmra.mxu0 %v1325
      %v1369 = vpop.f32.mrf.mxu0
      %v1370 = vadd.f32 0.0, %v1369
      %v1371 = vpop.f32.mrf.mxu0
      %v1372 = vadd.f32 0.0, %v1371
      %1373 = vmatmul.bf16.gmra.mxu0 %v1327
      %v1374 = vpop.f32.mrf.mxu0
      %v1375 = vadd.f32 0.0, %v1374
      %v1376 = vpop.f32.mrf.mxu0
      %v1377 = vadd.f32 0.0, %v1376
      %1378 = vmatmul.bf16.gmra.mxu0 %v1329
      %v1379 = vpop.f32.mrf.mxu0
      %v1380 = vadd.f32 0.0, %v1379
      %v1381 = vpop.f32.mrf.mxu0
      %v1382 = vadd.f32 0.0, %v1381
      %1383 = vmatmul.bf16.gmra.mxu0 %v1331
      %v1384 = vpop.f32.mrf.mxu0
      %v1385 = vadd.f32 0.0, %v1384
      %v1386 = vpop.f32.mrf.mxu0
      %v1387 = vadd.f32 0.0, %v1386
      %1388 = vmatmul.bf16.gmra.mxu0 %v1333
      %v1389 = vpop.f32.mrf.mxu0
      %v1390 = vadd.f32 0.0, %v1389
      %v1391 = vpop.f32.mrf.mxu0
      %v1392 = vadd.f32 0.0, %v1391
      %1393 = vmatmul.bf16.gmra.mxu0 %v1335
      %v1394 = vpop.f32.mrf.mxu0
      %v1395 = vadd.f32 0.0, %v1394
      %v1396 = vpop.f32.mrf.mxu0
      %v1397 = vadd.f32 0.0, %v1396
      %1398 = vmatmul.bf16.gmra.mxu0 %v1337
      %v1399 = vpop.f32.mrf.mxu0
      %v1400 = vadd.f32 0.0, %v1399
      %v1401 = vpop.f32.mrf.mxu0
      %v1402 = vadd.f32 0.0, %v1401
      %1403 = vdwg.mxu0
      %1404 = vmatpush.bf16.msra.mxu0 %v653
      %1405 = vmatpush.bf16.msra.mxu0 %v652
      %1406 = vmatpush.bf16.msra.mxu0 %v651
      %1407 = vmatpush.bf16.msra.mxu0 %v650
      %1408 = vmatpush.bf16.msra.mxu0 %v649
      %1409 = vmatpush.bf16.msra.mxu0 %v648
      %1410 = vmatpush.bf16.msra.mxu0 %v647
      %1411 = vmatpush.bf16.msra.mxu0 %v646
      %1412 = vmatmul.bf16.gmra.mxu0 %v1324
      %v1413 = vpop.f32.mrf.mxu0
      %v1414 = vadd.f32 %v1365, %v1413
      %v1415 = vpop.f32.mrf.mxu0
      %v1416 = vadd.f32 %v1367, %v1415
      %1417 = vmatmul.bf16.gmra.mxu0 %v1326
      %v1418 = vpop.f32.mrf.mxu0
      %v1419 = vadd.f32 %v1370, %v1418
      %v1420 = vpop.f32.mrf.mxu0
      %v1421 = vadd.f32 %v1372, %v1420
      %1422 = vmatmul.bf16.gmra.mxu0 %v1328
      %v1423 = vpop.f32.mrf.mxu0
      %v1424 = vadd.f32 %v1375, %v1423
      %v1425 = vpop.f32.mrf.mxu0
      %v1426 = vadd.f32 %v1377, %v1425
      %1427 = vmatmul.bf16.gmra.mxu0 %v1330
      %v1428 = vpop.f32.mrf.mxu0
      %v1429 = vadd.f32 %v1380, %v1428
      %v1430 = vpop.f32.mrf.mxu0
      %v1431 = vadd.f32 %v1382, %v1430
      %1432 = vmatmul.bf16.gmra.mxu0 %v1332
      %v1433 = vpop.f32.mrf.mxu0
      %v1434 = vadd.f32 %v1385, %v1433
      %v1435 = vpop.f32.mrf.mxu0
      %v1436 = vadd.f32 %v1387, %v1435
      %1437 = vmatmul.bf16.gmra.mxu0 %v1334
      %v1438 = vpop.f32.mrf.mxu0
      %v1439 = vadd.f32 %v1390, %v1438
      %v1440 = vpop.f32.mrf.mxu0
      %v1441 = vadd.f32 %v1392, %v1440
      %1442 = vmatmul.bf16.gmra.mxu0 %v1336
      %v1443 = vpop.f32.mrf.mxu0
      %v1444 = vadd.f32 %v1395, %v1443
      %v1445 = vpop.f32.mrf.mxu0
      %v1446 = vadd.f32 %v1397, %v1445
      %1447 = vmatmul.bf16.gmra.mxu0 %v1338
      %v1448 = vpop.f32.mrf.mxu0
      %v1449 = vadd.f32 %v1400, %v1448
      %v1450 = vpop.f32.mrf.mxu0
      %v1451 = vadd.f32 %v1402, %v1450
      %1452 = vdwg.mxu0
      %v1453 = vpack.c.bf16 %v1416, %v1414
      %v1454 = vpack.c.bf16 %v1421, %v1419
      %v1455 = vpack.c.bf16 %v1426, %v1424
      %v1456 = vpack.c.bf16 %v1431, %v1429
      %v1457 = vpack.c.bf16 %v1436, %v1434
      %v1458 = vpack.c.bf16 %v1441, %v1439
      %v1459 = vpack.c.bf16 %v1446, %v1444
      %v1460 = vpack.c.bf16 %v1451, %v1449
      %s1461 = scalar_lea.vmem %s1, 96
      %v1462 = vld [vmem:[%s1461] sm:$0xf]
      %v1463 = vld [vmem:[%s1461 + $0x4] sm:$0xf]
      %v1464 = vld [vmem:[%s1461 + $0x8] sm:$0xf]
      %v1465 = vld [vmem:[%s1461 + $0xc] sm:$0xf]
      %v1466 = vld [vmem:[%s1461 + $0x10] sm:$0xf]
      %v1467 = vld [vmem:[%s1461 + $0x14] sm:$0xf]
      %v1468 = vld [vmem:[%s1461 + $0x18] sm:$0xf]
      %v1469 = vld [vmem:[%s1461 + $0x1c] sm:$0xf]
      %v1470 = vld [vmem:[%s1461 + $0x20] sm:$0xf]
      %v1471 = vld [vmem:[%s1461 + $0x24] sm:$0xf]
      %v1472 = vld [vmem:[%s1461 + $0x28] sm:$0xf]
      %v1473 = vld [vmem:[%s1461 + $0x2c] sm:$0xf]
      %v1486 = vunpack.c.l.b16 %v1462
      %v1487 = vunpack.c.l.b16 %v1463
      %v1488 = vunpack.c.l.b16 %v1464
      %v1489 = vunpack.c.l.b16 %v1465
      %v1490 = vunpack.c.l.b16 %v1466
      %v1491 = vunpack.c.l.b16 %v1467
      %v1492 = vunpack.c.l.b16 %v1468
      %v1493 = vunpack.c.l.b16 %v1469
      %v1494 = vunpack.c.l.b16 %v1470
      %v1495 = vunpack.c.l.b16 %v1471
      %v1496 = vunpack.c.l.b16 %v1472
      %v1497 = vunpack.c.l.b16 %v1473
      %v1498 = vpack.c.b16 %v1487, %v1486
      %v1499 = vpack.c.b16 %v1489, %v1488
      %v1500 = vpack.c.b16 %v1491, %v1490
      %v1501 = vpack.c.b16 %v1493, %v1492
      %v1502 = vpack.c.b16 %v1495, %v1494
      %v1503 = vpack.c.b16 %v1497, %v1496
      %v1511 = vsel %vm824, %v1453, 0
      %v1514 = vsel %vm824, %v1454, 0
      %v1517 = vsel %vm824, %v1455, 0
      %v1520 = vsel %vm824, %v1456, 0
      %v1523 = vsel %vm824, %v1457, 0
      %v1526 = vsel %vm824, %v1458, 0
      %v1529 = vsel %vm824, %v1459, 0
      %v1532 = vsel %vm824, %v1460, 0
      %1534 = vmatpush.bf16.msra.mxu0 0
      %1535 = vmatpush.bf16.msra.mxu0 0
      %1536 = vmatpush.bf16.msra.mxu0 %v1503
      %1537 = vmatpush.bf16.msra.mxu0 %v1502
      %1538 = vmatpush.bf16.msra.mxu0 %v1501
      %1539 = vmatpush.bf16.msra.mxu0 %v1500
      %1540 = vmatpush.bf16.msra.mxu0 %v1499
      %1541 = vmatpush.bf16.msra.mxu0 %v1498
      %1542 = vmatmul.bf16.gmra.mxu0 %v1511
      %v1543 = vpop.f32.mrf.mxu0
      %v1544 = vadd.f32 0.0, %v1543
      %v1545 = vpop.f32.mrf.mxu0
      %v1546 = vadd.f32 0.0, %v1545
      %1547 = vmatmul.bf16.gmra.mxu0 %v1514
      %v1548 = vpop.f32.mrf.mxu0
      %v1549 = vadd.f32 0.0, %v1548
      %v1550 = vpop.f32.mrf.mxu0
      %v1551 = vadd.f32 0.0, %v1550
      %1552 = vmatmul.bf16.gmra.mxu0 %v1517
      %v1553 = vpop.f32.mrf.mxu0
      %v1554 = vadd.f32 0.0, %v1553
      %v1555 = vpop.f32.mrf.mxu0
      %v1556 = vadd.f32 0.0, %v1555
      %1557 = vmatmul.bf16.gmra.mxu0 %v1520
      %v1558 = vpop.f32.mrf.mxu0
      %v1559 = vadd.f32 0.0, %v1558
      %v1560 = vpop.f32.mrf.mxu0
      %v1561 = vadd.f32 0.0, %v1560
      %1562 = vmatmul.bf16.gmra.mxu0 %v1523
      %v1563 = vpop.f32.mrf.mxu0
      %v1564 = vadd.f32 0.0, %v1563
      %v1565 = vpop.f32.mrf.mxu0
      %v1566 = vadd.f32 0.0, %v1565
      %1567 = vmatmul.bf16.gmra.mxu0 %v1526
      %v1568 = vpop.f32.mrf.mxu0
      %v1569 = vadd.f32 0.0, %v1568
      %v1570 = vpop.f32.mrf.mxu0
      %v1571 = vadd.f32 0.0, %v1570
      %1572 = vmatmul.bf16.gmra.mxu0 %v1529
      %v1573 = vpop.f32.mrf.mxu0
      %v1574 = vadd.f32 0.0, %v1573
      %v1575 = vpop.f32.mrf.mxu0
      %v1576 = vadd.f32 0.0, %v1575
      %1577 = vmatmul.bf16.gmra.mxu0 %v1532
      %v1578 = vpop.f32.mrf.mxu0
      %v1579 = vadd.f32 0.0, %v1578
      %v1580 = vpop.f32.mrf.mxu0
      %v1581 = vadd.f32 0.0, %v1580
      %1582 = vdwg.mxu0
      %v1583 = vadd.f32 %v1242, %v1544
      %v1584 = vadd.f32 %v1243, %v1546
      %v1585 = vadd.f32 %v1244, %v1549
      %v1586 = vadd.f32 %v1245, %v1551
      %v1587 = vadd.f32 %v1246, %v1554
      %v1588 = vadd.f32 %v1247, %v1556
      %v1589 = vadd.f32 %v1248, %v1559
      %v1590 = vadd.f32 %v1249, %v1561
      %v1591 = vadd.f32 %v1250, %v1564
      %v1592 = vadd.f32 %v1251, %v1566
      %v1593 = vadd.f32 %v1252, %v1569
      %v1594 = vadd.f32 %v1253, %v1571
      %v1595 = vadd.f32 %v1254, %v1574
      %v1596 = vadd.f32 %v1255, %v1576
      %v1597 = vadd.f32 %v1256, %v1579
      %v1598 = vadd.f32 %v1257, %v1581
      %vm1599 = vcmp.gt.f32.partialorder %v1583, 0.0
      %vm1600 = vcmp.gt.f32.partialorder %v1584, 0.0
      %vm1601 = vcmp.gt.f32.partialorder %v1585, 0.0
      %vm1602 = vcmp.gt.f32.partialorder %v1586, 0.0
      %vm1603 = vcmp.gt.f32.partialorder %v1587, 0.0
      %vm1604 = vcmp.gt.f32.partialorder %v1588, 0.0
      %vm1605 = vcmp.gt.f32.partialorder %v1589, 0.0
      %vm1606 = vcmp.gt.f32.partialorder %v1590, 0.0
      %vm1607 = vcmp.gt.f32.partialorder %v1591, 0.0
      %vm1608 = vcmp.gt.f32.partialorder %v1592, 0.0
      %vm1609 = vcmp.gt.f32.partialorder %v1593, 0.0
      %vm1610 = vcmp.gt.f32.partialorder %v1594, 0.0
      %vm1611 = vcmp.gt.f32.partialorder %v1595, 0.0
      %vm1612 = vcmp.gt.f32.partialorder %v1596, 0.0
      %vm1613 = vcmp.gt.f32.partialorder %v1597, 0.0
      %vm1614 = vcmp.gt.f32.partialorder %v1598, 0.0
      %v1615 = vmul.f32 %v1583, 0.01
      %v1616 = vmul.f32 %v1584, 0.01
      %v1617 = vmul.f32 %v1585, 0.01
      %v1618 = vmul.f32 %v1586, 0.01
      %v1619 = vmul.f32 %v1587, 0.01
      %v1620 = vmul.f32 %v1588, 0.01
      %v1621 = vmul.f32 %v1589, 0.01
      %v1622 = vmul.f32 %v1590, 0.01
      %v1623 = vmul.f32 %v1591, 0.01
      %v1624 = vmul.f32 %v1592, 0.01
      %v1625 = vmul.f32 %v1593, 0.01
      %v1626 = vmul.f32 %v1594, 0.01
      %v1627 = vmul.f32 %v1595, 0.01
      %v1628 = vmul.f32 %v1596, 0.01
      %v1629 = vmul.f32 %v1597, 0.01
      %v1630 = vmul.f32 %v1598, 0.01
      %v1631 = vsel %vm1599, %v1583, %v1615
      %v1632 = vsel %vm1600, %v1584, %v1616
      %v1633 = vsel %vm1601, %v1585, %v1617
      %v1634 = vsel %vm1602, %v1586, %v1618
      %v1635 = vsel %vm1603, %v1587, %v1619
      %v1636 = vsel %vm1604, %v1588, %v1620
      %v1637 = vsel %vm1605, %v1589, %v1621
      %v1638 = vsel %vm1606, %v1590, %v1622
      %v1639 = vsel %vm1607, %v1591, %v1623
      %v1640 = vsel %vm1608, %v1592, %v1624
      %v1641 = vsel %vm1609, %v1593, %v1625
      %v1642 = vsel %vm1610, %v1594, %v1626
      %v1643 = vsel %vm1611, %v1595, %v1627
      %v1644 = vsel %vm1612, %v1596, %v1628
      %v1645 = vsel %vm1613, %v1597, %v1629
      %v1646 = vsel %vm1614, %v1598, %v1630
      %v1647 = vpack.c.bf16 %v1632, %v1631
      %v1648 = vpack.c.bf16 %v1634, %v1633
      %v1649 = vpack.c.bf16 %v1636, %v1635
      %v1650 = vpack.c.bf16 %v1638, %v1637
      %v1651 = vpack.c.bf16 %v1640, %v1639
      %v1652 = vpack.c.bf16 %v1642, %v1641
      %v1653 = vpack.c.bf16 %v1644, %v1643
      %v1654 = vpack.c.bf16 %v1646, %v1645
      %v1655 = vld [vmem:[%s6] sm:$0x1]
      %v1656 = vld [vmem:[%s5] sm:$0xf]
      %v1657 = vld [vmem:[%s5 + $0x4] sm:$0xf]
      %v1658 = vld [vmem:[%s5 + $0x8] sm:$0xf]
      %v1659 = vld [vmem:[%s5 + $0xc] sm:$0xf]
      %v1660 = vld [vmem:[%s5 + $0x10] sm:$0xf]
      %v1661 = vld [vmem:[%s5 + $0x14] sm:$0xf]
      %v1662 = vld [vmem:[%s5 + $0x18] sm:$0xf]
      %v1663 = vld [vmem:[%s5 + $0x1c] sm:$0xf]
      %v1672 = vunpack.c.l.b16 %v1656
      %v1673 = vunpack.c.l.b16 %v1657
      %v1674 = vunpack.c.l.b16 %v1658
      %v1675 = vunpack.c.l.b16 %v1659
      %v1676 = vunpack.c.l.b16 %v1660
      %v1677 = vunpack.c.l.b16 %v1661
      %v1678 = vunpack.c.l.b16 %v1662
      %v1679 = vunpack.c.l.b16 %v1663
      %v1680 = vpack.c.b16 %v1673, %v1672
      %v1681 = vpack.c.b16 %v1675, %v1674
      %v1682 = vpack.c.b16 %v1677, %v1676
      %v1683 = vpack.c.b16 %v1679, %v1678
      %1688 = vmatpush.bf16.msra.mxu0 %v1654
      %1689 = vmatpush.bf16.msra.mxu0 %v1653
      %1690 = vmatpush.bf16.msra.mxu0 %v1652
      %1691 = vmatpush.bf16.msra.mxu0 %v1651
      %1692 = vmatpush.bf16.msra.mxu0 %v1650
      %1693 = vmatpush.bf16.msra.mxu0 %v1649
      %1694 = vmatpush.bf16.msra.mxu0 %v1648
      %1695 = vmatpush.bf16.msra.mxu0 %v1647
      %1696 = vmatmul.bf16.gmra.mxu0 %v1680
      %v1697 = vpop.f32.mrf.mxu0
      %v1698 = vadd.f32 0.0, %v1697
      %v1699 = vpop.f32.mrf.mxu0
      %v1700 = vadd.f32 0.0, %v1699
      %1701 = vmatmul.bf16.gmra.mxu0 %v1681
      %v1702 = vpop.f32.mrf.mxu0
      %v1703 = vadd.f32 0.0, %v1702
      %v1704 = vpop.f32.mrf.mxu0
      %v1705 = vadd.f32 0.0, %v1704
      %1706 = vmatmul.bf16.gmra.mxu0 %v1682
      %v1707 = vpop.f32.mrf.mxu0
      %v1708 = vadd.f32 0.0, %v1707
      %v1709 = vpop.f32.mrf.mxu0
      %v1710 = vadd.f32 0.0, %v1709
      %1711 = vmatmul.bf16.gmra.mxu0 %v1683
      %v1712 = vpop.f32.mrf.mxu0
      %v1713 = vadd.f32 0.0, %v1712
      %v1714 = vpop.f32.mrf.mxu0
      %v1715 = vadd.f32 0.0, %v1714
      %1716 = vdwg.mxu0
      %v1717 = vpack.c.bf16 %v1700, %v1698
      %v1718 = vpack.c.bf16 %v1705, %v1703
      %v1719 = vpack.c.bf16 %v1710, %v1708
      %v1720 = vpack.c.bf16 %v1715, %v1713
      %v1721 = vld [vmem:[%s4] sm:$0xf]
      %v1722 = vld [vmem:[%s4 + $0x4] sm:$0xf]
      %v1723 = vld [vmem:[%s4 + $0x8] sm:$0xf]
      %v1724 = vld [vmem:[%s4 + $0xc] sm:$0xf]
      %v1725 = vld [vmem:[%s4 + $0x10] sm:$0xf]
      %v1726 = vld [vmem:[%s4 + $0x14] sm:$0xf]
      %v1727 = vld [vmem:[%s4 + $0x18] sm:$0xf]
      %v1728 = vld [vmem:[%s4 + $0x1c] sm:$0xf]
      %v1729 = vld [vmem:[%s4 + $0x20] sm:$0xf]
      %v1730 = vld [vmem:[%s4 + $0x24] sm:$0xf]
      %v1731 = vld [vmem:[%s4 + $0x28] sm:$0xf]
      %v1732 = vld [vmem:[%s4 + $0x2c] sm:$0xf]
      %v1733 = vld [vmem:[%s4 + $0x30] sm:$0xf]
      %v1734 = vld [vmem:[%s4 + $0x34] sm:$0xf]
      %v1735 = vld [vmem:[%s4 + $0x38] sm:$0xf]
      %v1736 = vld [vmem:[%s4 + $0x3c] sm:$0xf]
      %v1753 = vunpack.c.l.b16 %v1721
      %v1754 = vunpack.c.l.b16 %v1722
      %v1755 = vunpack.c.l.b16 %v1723
      %v1756 = vunpack.c.l.b16 %v1724
      %v1757 = vunpack.c.l.b16 %v1725
      %v1758 = vunpack.c.l.b16 %v1726
      %v1759 = vunpack.c.l.b16 %v1727
      %v1760 = vunpack.c.l.b16 %v1728
      %v1761 = vunpack.c.l.b16 %v1729
      %v1762 = vunpack.c.l.b16 %v1730
      %v1763 = vunpack.c.l.b16 %v1731
      %v1764 = vunpack.c.l.b16 %v1732
      %v1765 = vunpack.c.l.b16 %v1733
      %v1766 = vunpack.c.l.b16 %v1734
      %v1767 = vunpack.c.l.b16 %v1735
      %v1768 = vunpack.c.l.b16 %v1736
      %v1769 = vpack.c.b16 %v1754, %v1753
      %v1770 = vpack.c.b16 %v1756, %v1755
      %v1771 = vpack.c.b16 %v1758, %v1757
      %v1772 = vpack.c.b16 %v1760, %v1759
      %v1773 = vpack.c.b16 %v1762, %v1761
      %v1774 = vpack.c.b16 %v1764, %v1763
      %v1775 = vpack.c.b16 %v1766, %v1765
      %v1776 = vpack.c.b16 %v1768, %v1767
      %1785 = vmatpush.bf16.msra.mxu0 %v1776
      %1786 = vmatpush.bf16.msra.mxu0 %v1775
      %1787 = vmatpush.bf16.msra.mxu0 %v1774
      %1788 = vmatpush.bf16.msra.mxu0 %v1773
      %1789 = vmatpush.bf16.msra.mxu0 %v1772
      %1790 = vmatpush.bf16.msra.mxu0 %v1771
      %1791 = vmatpush.bf16.msra.mxu0 %v1770
      %1792 = vmatpush.bf16.msra.mxu0 %v1769
      %1793 = vmatmul.bf16.gmra.mxu0 %v1717
      %v1794 = vpop.f32.mrf.mxu0
      %v1795 = vadd.f32 0.0, %v1794
      %v1796 = vpop.f32.mrf.mxu0
      %v1797 = vadd.f32 0.0, %v1796
      %1798 = vmatmul.bf16.gmra.mxu0 %v1718
      %v1799 = vpop.f32.mrf.mxu0
      %v1800 = vadd.f32 0.0, %v1799
      %v1801 = vpop.f32.mrf.mxu0
      %v1802 = vadd.f32 0.0, %v1801
      %1803 = vmatmul.bf16.gmra.mxu0 %v1719
      %v1804 = vpop.f32.mrf.mxu0
      %v1805 = vadd.f32 0.0, %v1804
      %v1806 = vpop.f32.mrf.mxu0
      %v1807 = vadd.f32 0.0, %v1806
      %1808 = vmatmul.bf16.gmra.mxu0 %v1720
      %v1809 = vpop.f32.mrf.mxu0
      %v1810 = vadd.f32 0.0, %v1809
      %v1811 = vpop.f32.mrf.mxu0
      %v1812 = vadd.f32 0.0, %v1811
      %1813 = vdwg.mxu0
      %v1815 = vperm.slane %v1655, 0
      %v1817 = vadd.f32 %v1815, %v1795
      %v1818 = vadd.f32 %v1815, %v1797
      %v1819 = vadd.f32 %v1815, %v1800
      %v1820 = vadd.f32 %v1815, %v1802
      %v1821 = vadd.f32 %v1815, %v1805
      %v1822 = vadd.f32 %v1815, %v1807
      %v1823 = vadd.f32 %v1815, %v1810
      %v1824 = vadd.f32 %v1815, %v1812
      %s1825 = scalar_lea.vmem %s5, 32
      %v1826 = vld [vmem:[%s1825] sm:$0xf]
      %v1827 = vld [vmem:[%s1825 + $0x4] sm:$0xf]
      %v1828 = vld [vmem:[%s1825 + $0x8] sm:$0xf]
      %v1829 = vld [vmem:[%s1825 + $0xc] sm:$0xf]
      %v1830 = vld [vmem:[%s1825 + $0x10] sm:$0xf]
      %v1831 = vld [vmem:[%s1825 + $0x14] sm:$0xf]
      %v1832 = vld [vmem:[%s1825 + $0x18] sm:$0xf]
      %v1833 = vld [vmem:[%s1825 + $0x1c] sm:$0xf]
      %v1842 = vunpack.c.l.b16 %v1826
      %v1843 = vunpack.c.l.b16 %v1827
      %v1844 = vunpack.c.l.b16 %v1828
      %v1845 = vunpack.c.l.b16 %v1829
      %v1846 = vunpack.c.l.b16 %v1830
      %v1847 = vunpack.c.l.b16 %v1831
      %v1848 = vunpack.c.l.b16 %v1832
      %v1849 = vunpack.c.l.b16 %v1833
      %v1850 = vpack.c.b16 %v1843, %v1842
      %v1851 = vpack.c.b16 %v1845, %v1844
      %v1852 = vpack.c.b16 %v1847, %v1846
      %v1853 = vpack.c.b16 %v1849, %v1848
      %1858 = vmatpush.bf16.msra.mxu0 %v1654
      %1859 = vmatpush.bf16.msra.mxu0 %v1653
      %1860 = vmatpush.bf16.msra.mxu0 %v1652
      %1861 = vmatpush.bf16.msra.mxu0 %v1651
      %1862 = vmatpush.bf16.msra.mxu0 %v1650
      %1863 = vmatpush.bf16.msra.mxu0 %v1649
      %1864 = vmatpush.bf16.msra.mxu0 %v1648
      %1865 = vmatpush.bf16.msra.mxu0 %v1647
      %1866 = vmatmul.bf16.gmra.mxu0 %v1850
      %v1867 = vpop.f32.mrf.mxu0
      %v1868 = vadd.f32 0.0, %v1867
      %v1869 = vpop.f32.mrf.mxu0
      %v1870 = vadd.f32 0.0, %v1869
      %1871 = vmatmul.bf16.gmra.mxu0 %v1851
      %v1872 = vpop.f32.mrf.mxu0
      %v1873 = vadd.f32 0.0, %v1872
      %v1874 = vpop.f32.mrf.mxu0
      %v1875 = vadd.f32 0.0, %v1874
      %1876 = vmatmul.bf16.gmra.mxu0 %v1852
      %v1877 = vpop.f32.mrf.mxu0
      %v1878 = vadd.f32 0.0, %v1877
      %v1879 = vpop.f32.mrf.mxu0
      %v1880 = vadd.f32 0.0, %v1879
      %1881 = vmatmul.bf16.gmra.mxu0 %v1853
      %v1882 = vpop.f32.mrf.mxu0
      %v1883 = vadd.f32 0.0, %v1882
      %v1884 = vpop.f32.mrf.mxu0
      %v1885 = vadd.f32 0.0, %v1884
      %1886 = vdwg.mxu0
      %v1887 = vpack.c.bf16 %v1870, %v1868
      %v1888 = vpack.c.bf16 %v1875, %v1873
      %v1889 = vpack.c.bf16 %v1880, %v1878
      %v1890 = vpack.c.bf16 %v1885, %v1883
      %s1891 = scalar_lea.vmem %s4, 64
      %v1892 = vld [vmem:[%s1891] sm:$0xf]
      %v1893 = vld [vmem:[%s1891 + $0x4] sm:$0xf]
      %v1894 = vld [vmem:[%s1891 + $0x8] sm:$0xf]
      %v1895 = vld [vmem:[%s1891 + $0xc] sm:$0xf]
      %v1896 = vld [vmem:[%s1891 + $0x10] sm:$0xf]
      %v1897 = vld [vmem:[%s1891 + $0x14] sm:$0xf]
      %v1898 = vld [vmem:[%s1891 + $0x18] sm:$0xf]
      %v1899 = vld [vmem:[%s1891 + $0x1c] sm:$0xf]
      %v1900 = vld [vmem:[%s1891 + $0x20] sm:$0xf]
      %v1901 = vld [vmem:[%s1891 + $0x24] sm:$0xf]
      %v1902 = vld [vmem:[%s1891 + $0x28] sm:$0xf]
      %v1903 = vld [vmem:[%s1891 + $0x2c] sm:$0xf]
      %v1904 = vld [vmem:[%s1891 + $0x30] sm:$0xf]
      %v1905 = vld [vmem:[%s1891 + $0x34] sm:$0xf]
      %v1906 = vld [vmem:[%s1891 + $0x38] sm:$0xf]
      %v1907 = vld [vmem:[%s1891 + $0x3c] sm:$0xf]
      %v1924 = vunpack.c.l.b16 %v1892
      %v1925 = vunpack.c.l.b16 %v1893
      %v1926 = vunpack.c.l.b16 %v1894
      %v1927 = vunpack.c.l.b16 %v1895
      %v1928 = vunpack.c.l.b16 %v1896
      %v1929 = vunpack.c.l.b16 %v1897
      %v1930 = vunpack.c.l.b16 %v1898
      %v1931 = vunpack.c.l.b16 %v1899
      %v1932 = vunpack.c.l.b16 %v1900
      %v1933 = vunpack.c.l.b16 %v1901
      %v1934 = vunpack.c.l.b16 %v1902
      %v1935 = vunpack.c.l.b16 %v1903
      %v1936 = vunpack.c.l.b16 %v1904
      %v1937 = vunpack.c.l.b16 %v1905
      %v1938 = vunpack.c.l.b16 %v1906
      %v1939 = vunpack.c.l.b16 %v1907
      %v1940 = vpack.c.b16 %v1925, %v1924
      %v1941 = vpack.c.b16 %v1927, %v1926
      %v1942 = vpack.c.b16 %v1929, %v1928
      %v1943 = vpack.c.b16 %v1931, %v1930
      %v1944 = vpack.c.b16 %v1933, %v1932
      %v1945 = vpack.c.b16 %v1935, %v1934
      %v1946 = vpack.c.b16 %v1937, %v1936
      %v1947 = vpack.c.b16 %v1939, %v1938
      %1956 = vmatpush.bf16.msra.mxu0 %v1947
      %1957 = vmatpush.bf16.msra.mxu0 %v1946
      %1958 = vmatpush.bf16.msra.mxu0 %v1945
      %1959 = vmatpush.bf16.msra.mxu0 %v1944
      %1960 = vmatpush.bf16.msra.mxu0 %v1943
      %1961 = vmatpush.bf16.msra.mxu0 %v1942
      %1962 = vmatpush.bf16.msra.mxu0 %v1941
      %1963 = vmatpush.bf16.msra.mxu0 %v1940
      %1964 = vmatmul.bf16.gmra.mxu0 %v1887
      %v1965 = vpop.f32.mrf.mxu0
      %v1966 = vadd.f32 0.0, %v1965
      %v1967 = vpop.f32.mrf.mxu0
      %v1968 = vadd.f32 0.0, %v1967
      %1969 = vmatmul.bf16.gmra.mxu0 %v1888
      %v1970 = vpop.f32.mrf.mxu0
      %v1971 = vadd.f32 0.0, %v1970
      %v1972 = vpop.f32.mrf.mxu0
      %v1973 = vadd.f32 0.0, %v1972
      %1974 = vmatmul.bf16.gmra.mxu0 %v1889
      %v1975 = vpop.f32.mrf.mxu0
      %v1976 = vadd.f32 0.0, %v1975
      %v1977 = vpop.f32.mrf.mxu0
      %v1978 = vadd.f32 0.0, %v1977
      %1979 = vmatmul.bf16.gmra.mxu0 %v1890
      %v1980 = vpop.f32.mrf.mxu0
      %v1981 = vadd.f32 0.0, %v1980
      %v1982 = vpop.f32.mrf.mxu0
      %v1983 = vadd.f32 0.0, %v1982
      %1984 = vdwg.mxu0
      %v1985 = vadd.f32 %v1817, %v1966
      %v1986 = vadd.f32 %v1818, %v1968
      %v1987 = vadd.f32 %v1819, %v1971
      %v1988 = vadd.f32 %v1820, %v1973
      %v1989 = vadd.f32 %v1821, %v1976
      %v1990 = vadd.f32 %v1822, %v1978
      %v1991 = vadd.f32 %v1823, %v1981
      %v1992 = vadd.f32 %v1824, %v1983
      %s1993 = scalar_lea.vmem %s5, 64
      %v1994 = vld [vmem:[%s1993] sm:$0xf]
      %v1995 = vld [vmem:[%s1993 + $0x4] sm:$0xf]
      %v1996 = vld [vmem:[%s1993 + $0x8] sm:$0xf]
      %v1997 = vld [vmem:[%s1993 + $0xc] sm:$0xf]
      %v1998 = vld [vmem:[%s1993 + $0x10] sm:$0xf]
      %v1999 = vld [vmem:[%s1993 + $0x14] sm:$0xf]
      %v2000 = vld [vmem:[%s1993 + $0x18] sm:$0xf]
      %v2001 = vld [vmem:[%s1993 + $0x1c] sm:$0xf]
      %v2010 = vunpack.c.l.b16 %v1994
      %v2011 = vunpack.c.l.b16 %v1995
      %v2012 = vunpack.c.l.b16 %v1996
      %v2013 = vunpack.c.l.b16 %v1997
      %v2014 = vunpack.c.l.b16 %v1998
      %v2015 = vunpack.c.l.b16 %v1999
      %v2016 = vunpack.c.l.b16 %v2000
      %v2017 = vunpack.c.l.b16 %v2001
      %v2018 = vpack.c.b16 %v2011, %v2010
      %v2019 = vpack.c.b16 %v2013, %v2012
      %v2020 = vpack.c.b16 %v2015, %v2014
      %v2021 = vpack.c.b16 %v2017, %v2016
      %2026 = vmatpush.bf16.msra.mxu0 %v1654
      %2027 = vmatpush.bf16.msra.mxu0 %v1653
      %2028 = vmatpush.bf16.msra.mxu0 %v1652
      %2029 = vmatpush.bf16.msra.mxu0 %v1651
      %2030 = vmatpush.bf16.msra.mxu0 %v1650
      %2031 = vmatpush.bf16.msra.mxu0 %v1649
      %2032 = vmatpush.bf16.msra.mxu0 %v1648
      %2033 = vmatpush.bf16.msra.mxu0 %v1647
      %2034 = vmatmul.bf16.gmra.mxu0 %v2018
      %v2035 = vpop.f32.mrf.mxu0
      %v2036 = vadd.f32 0.0, %v2035
      %v2037 = vpop.f32.mrf.mxu0
      %v2038 = vadd.f32 0.0, %v2037
      %2039 = vmatmul.bf16.gmra.mxu0 %v2019
      %v2040 = vpop.f32.mrf.mxu0
      %v2041 = vadd.f32 0.0, %v2040
      %v2042 = vpop.f32.mrf.mxu0
      %v2043 = vadd.f32 0.0, %v2042
      %2044 = vmatmul.bf16.gmra.mxu0 %v2020
      %v2045 = vpop.f32.mrf.mxu0
      %v2046 = vadd.f32 0.0, %v2045
      %v2047 = vpop.f32.mrf.mxu0
      %v2048 = vadd.f32 0.0, %v2047
      %2049 = vmatmul.bf16.gmra.mxu0 %v2021
      %v2050 = vpop.f32.mrf.mxu0
      %v2051 = vadd.f32 0.0, %v2050
      %v2052 = vpop.f32.mrf.mxu0
      %v2053 = vadd.f32 0.0, %v2052
      %2054 = vdwg.mxu0
      %v2055 = vpack.c.bf16 %v2038, %v2036
      %v2056 = vpack.c.bf16 %v2043, %v2041
      %v2057 = vpack.c.bf16 %v2048, %v2046
      %v2058 = vpack.c.bf16 %v2053, %v2051
      %s2059 = scalar_lea.vmem %s4, 128
      %v2060 = vld [vmem:[%s2059] sm:$0xf]
      %v2061 = vld [vmem:[%s2059 + $0x4] sm:$0xf]
      %v2062 = vld [vmem:[%s2059 + $0x8] sm:$0xf]
      %v2063 = vld [vmem:[%s2059 + $0xc] sm:$0xf]
      %v2064 = vld [vmem:[%s2059 + $0x10] sm:$0xf]
      %v2065 = vld [vmem:[%s2059 + $0x14] sm:$0xf]
      %v2066 = vld [vmem:[%s2059 + $0x18] sm:$0xf]
      %v2067 = vld [vmem:[%s2059 + $0x1c] sm:$0xf]
      %v2068 = vld [vmem:[%s2059 + $0x20] sm:$0xf]
      %v2069 = vld [vmem:[%s2059 + $0x24] sm:$0xf]
      %v2070 = vld [vmem:[%s2059 + $0x28] sm:$0xf]
      %v2071 = vld [vmem:[%s2059 + $0x2c] sm:$0xf]
      %v2072 = vld [vmem:[%s2059 + $0x30] sm:$0xf]
      %v2073 = vld [vmem:[%s2059 + $0x34] sm:$0xf]
      %v2074 = vld [vmem:[%s2059 + $0x38] sm:$0xf]
      %v2075 = vld [vmem:[%s2059 + $0x3c] sm:$0xf]
      %v2092 = vunpack.c.l.b16 %v2060
      %v2093 = vunpack.c.l.b16 %v2061
      %v2094 = vunpack.c.l.b16 %v2062
      %v2095 = vunpack.c.l.b16 %v2063
      %v2096 = vunpack.c.l.b16 %v2064
      %v2097 = vunpack.c.l.b16 %v2065
      %v2098 = vunpack.c.l.b16 %v2066
      %v2099 = vunpack.c.l.b16 %v2067
      %v2100 = vunpack.c.l.b16 %v2068
      %v2101 = vunpack.c.l.b16 %v2069
      %v2102 = vunpack.c.l.b16 %v2070
      %v2103 = vunpack.c.l.b16 %v2071
      %v2104 = vunpack.c.l.b16 %v2072
      %v2105 = vunpack.c.l.b16 %v2073
      %v2106 = vunpack.c.l.b16 %v2074
      %v2107 = vunpack.c.l.b16 %v2075
      %v2108 = vpack.c.b16 %v2093, %v2092
      %v2109 = vpack.c.b16 %v2095, %v2094
      %v2110 = vpack.c.b16 %v2097, %v2096
      %v2111 = vpack.c.b16 %v2099, %v2098
      %v2112 = vpack.c.b16 %v2101, %v2100
      %v2113 = vpack.c.b16 %v2103, %v2102
      %v2114 = vpack.c.b16 %v2105, %v2104
      %v2115 = vpack.c.b16 %v2107, %v2106
      %2124 = vmatpush.bf16.msra.mxu0 %v2115
      %2125 = vmatpush.bf16.msra.mxu0 %v2114
      %2126 = vmatpush.bf16.msra.mxu0 %v2113
      %2127 = vmatpush.bf16.msra.mxu0 %v2112
      %2128 = vmatpush.bf16.msra.mxu0 %v2111
      %2129 = vmatpush.bf16.msra.mxu0 %v2110
      %2130 = vmatpush.bf16.msra.mxu0 %v2109
      %2131 = vmatpush.bf16.msra.mxu0 %v2108
      %2132 = vmatmul.bf16.gmra.mxu0 %v2055
      %v2133 = vpop.f32.mrf.mxu0
      %v2134 = vadd.f32 0.0, %v2133
      %v2135 = vpop.f32.mrf.mxu0
      %v2136 = vadd.f32 0.0, %v2135
      %2137 = vmatmul.bf16.gmra.mxu0 %v2056
      %v2138 = vpop.f32.mrf.mxu0
      %v2139 = vadd.f32 0.0, %v2138
      %v2140 = vpop.f32.mrf.mxu0
      %v2141 = vadd.f32 0.0, %v2140
      %2142 = vmatmul.bf16.gmra.mxu0 %v2057
      %v2143 = vpop.f32.mrf.mxu0
      %v2144 = vadd.f32 0.0, %v2143
      %v2145 = vpop.f32.mrf.mxu0
      %v2146 = vadd.f32 0.0, %v2145
      %2147 = vmatmul.bf16.gmra.mxu0 %v2058
      %v2148 = vpop.f32.mrf.mxu0
      %v2149 = vadd.f32 0.0, %v2148
      %v2150 = vpop.f32.mrf.mxu0
      %v2151 = vadd.f32 0.0, %v2150
      %2152 = vdwg.mxu0
      %v2153 = vadd.f32 %v1985, %v2134
      %v2154 = vadd.f32 %v1986, %v2136
      %v2155 = vadd.f32 %v1987, %v2139
      %v2156 = vadd.f32 %v1988, %v2141
      %v2157 = vadd.f32 %v1989, %v2144
      %v2158 = vadd.f32 %v1990, %v2146
      %v2159 = vadd.f32 %v1991, %v2149
      %v2160 = vadd.f32 %v1992, %v2151
      %vm2161 = vcmp.gt.f32.partialorder %v2153, 0.0
      %vm2162 = vcmp.gt.f32.partialorder %v2154, 0.0
      %vm2163 = vcmp.gt.f32.partialorder %v2155, 0.0
      %vm2164 = vcmp.gt.f32.partialorder %v2156, 0.0
      %vm2165 = vcmp.gt.f32.partialorder %v2157, 0.0
      %vm2166 = vcmp.gt.f32.partialorder %v2158, 0.0
      %vm2167 = vcmp.gt.f32.partialorder %v2159, 0.0
      %vm2168 = vcmp.gt.f32.partialorder %v2160, 0.0
      %v2169 = vmul.f32 %v2153, 0.01
      %v2170 = vmul.f32 %v2154, 0.01
      %v2171 = vmul.f32 %v2155, 0.01
      %v2172 = vmul.f32 %v2156, 0.01
      %v2173 = vmul.f32 %v2157, 0.01
      %v2174 = vmul.f32 %v2158, 0.01
      %v2175 = vmul.f32 %v2159, 0.01
      %v2176 = vmul.f32 %v2160, 0.01
      %v2177 = vsel %vm2161, %v2153, %v2169
      %v2178 = vsel %vm2162, %v2154, %v2170
      %v2179 = vsel %vm2163, %v2155, %v2171
      %v2180 = vsel %vm2164, %v2156, %v2172
      %v2181 = vsel %vm2165, %v2157, %v2173
      %v2182 = vsel %vm2166, %v2158, %v2174
      %v2183 = vsel %vm2167, %v2159, %v2175
      %v2184 = vsel %vm2168, %v2160, %v2176
      %v2185 = vpack.c.bf16 %v2178, %v2177
      %v2186 = vpack.c.bf16 %v2180, %v2179
      %v2187 = vpack.c.bf16 %v2182, %v2181
      %v2188 = vpack.c.bf16 %v2184, %v2183
      %v2189 = vld [vmem:[%s9] sm:$0x1]
      %v2190 = vld [vmem:[%s8] sm:$0xf]
      %v2191 = vld [vmem:[%s8 + $0x4] sm:$0xf]
      %v2192 = vld [vmem:[%s8 + $0x8] sm:$0xf]
      %v2193 = vld [vmem:[%s8 + $0xc] sm:$0xf]
      %v2198 = vunpack.c.l.b16 %v2190
      %v2199 = vunpack.c.l.b16 %v2191
      %v2200 = vunpack.c.l.b16 %v2192
      %v2201 = vunpack.c.l.b16 %v2193
      %v2202 = vpack.c.b16 %v2199, %v2198
      %v2203 = vpack.c.b16 %v2201, %v2200
      %vm2204 = vcmask 523264
      %v2206 = vsel %vm2204, %v2202, 0
      %v2209 = vsel %vm2204, %v2203, 0
      %2211 = vmatpush.bf16.msra.mxu0 0
      %2212 = vmatpush.bf16.msra.mxu0 0
      %2213 = vmatpush.bf16.msra.mxu0 0
      %2214 = vmatpush.bf16.msra.mxu0 0
      %2215 = vmatpush.bf16.msra.mxu0 %v2188
      %2216 = vmatpush.bf16.msra.mxu0 %v2187
      %2217 = vmatpush.bf16.msra.mxu0 %v2186
      %2218 = vmatpush.bf16.msra.mxu0 %v2185
      %2219 = vmatmul.bf16.gmra.mxu0 %v2206
      %v2220 = vpop.f32.mrf.mxu0
      %v2221 = vadd.f32 0.0, %v2220
      %v2222 = vpop.f32.mrf.mxu0
      %v2223 = vadd.f32 0.0, %v2222
      %2224 = vmatmul.bf16.gmra.mxu0 %v2209
      %v2225 = vpop.f32.mrf.mxu0
      %v2226 = vadd.f32 0.0, %v2225
      %v2227 = vpop.f32.mrf.mxu0
      %v2228 = vadd.f32 0.0, %v2227
      %2229 = vdwg.mxu0
      %v2230 = vpack.c.bf16 %v2223, %v2221
      %v2231 = vpack.c.bf16 %v2228, %v2226
      %v2232 = vld [vmem:[%s7] sm:$0xf]
      %v2233 = vld [vmem:[%s7 + $0x4] sm:$0xf]
      %v2234 = vld [vmem:[%s7 + $0x8] sm:$0xf]
      %v2235 = vld [vmem:[%s7 + $0xc] sm:$0xf]
      %v2236 = vld [vmem:[%s7 + $0x10] sm:$0xf]
      %v2237 = vld [vmem:[%s7 + $0x14] sm:$0xf]
      %v2238 = vld [vmem:[%s7 + $0x18] sm:$0xf]
      %v2239 = vld [vmem:[%s7 + $0x1c] sm:$0xf]
      %v2240 = vld [vmem:[%s7 + $0x20] sm:$0xf]
      %v2241 = vld [vmem:[%s7 + $0x24] sm:$0xf]
      %v2242 = vld [vmem:[%s7 + $0x28] sm:$0xf]
      %v2243 = vld [vmem:[%s7 + $0x2c] sm:$0xf]
      %v2244 = vld [vmem:[%s7 + $0x30] sm:$0xf]
      %v2245 = vld [vmem:[%s7 + $0x34] sm:$0xf]
      %v2246 = vld [vmem:[%s7 + $0x38] sm:$0xf]
      %v2247 = vld [vmem:[%s7 + $0x3c] sm:$0xf]
      %v2264 = vunpack.c.l.b16 %v2232
      %v2265 = vunpack.c.l.b16 %v2233
      %v2266 = vunpack.c.l.b16 %v2234
      %v2267 = vunpack.c.l.b16 %v2235
      %v2268 = vunpack.c.l.b16 %v2236
      %v2269 = vunpack.c.l.b16 %v2237
      %v2270 = vunpack.c.l.b16 %v2238
      %v2271 = vunpack.c.l.b16 %v2239
      %v2272 = vunpack.c.l.b16 %v2240
      %v2273 = vunpack.c.l.b16 %v2241
      %v2274 = vunpack.c.l.b16 %v2242
      %v2275 = vunpack.c.l.b16 %v2243
      %v2276 = vunpack.c.l.b16 %v2244
      %v2277 = vunpack.c.l.b16 %v2245
      %v2278 = vunpack.c.l.b16 %v2246
      %v2279 = vunpack.c.l.b16 %v2247
      %v2280 = vpack.c.b16 %v2265, %v2264
      %v2281 = vpack.c.b16 %v2267, %v2266
      %v2282 = vpack.c.b16 %v2269, %v2268
      %v2283 = vpack.c.b16 %v2271, %v2270
      %v2284 = vpack.c.b16 %v2273, %v2272
      %v2285 = vpack.c.b16 %v2275, %v2274
      %v2286 = vpack.c.b16 %v2277, %v2276
      %v2287 = vpack.c.b16 %v2279, %v2278
      %2296 = vmatpush.bf16.msra.mxu0 %v2287
      %2297 = vmatpush.bf16.msra.mxu0 %v2286
      %2298 = vmatpush.bf16.msra.mxu0 %v2285
      %2299 = vmatpush.bf16.msra.mxu0 %v2284
      %2300 = vmatpush.bf16.msra.mxu0 %v2283
      %2301 = vmatpush.bf16.msra.mxu0 %v2282
      %2302 = vmatpush.bf16.msra.mxu0 %v2281
      %2303 = vmatpush.bf16.msra.mxu0 %v2280
      %2304 = vmatmul.bf16.gmra.mxu0 %v2230
      %v2305 = vpop.f32.mrf.mxu0
      %v2306 = vadd.f32 0.0, %v2305
      %v2307 = vpop.f32.mrf.mxu0
      %v2308 = vadd.f32 0.0, %v2307
      %2309 = vmatmul.bf16.gmra.mxu0 %v2231
      %v2310 = vpop.f32.mrf.mxu0
      %v2311 = vadd.f32 0.0, %v2310
      %v2312 = vpop.f32.mrf.mxu0
      %v2313 = vadd.f32 0.0, %v2312
      %2314 = vdwg.mxu0
      %v2316 = vperm.slane %v2189, 0
      %v2318 = vadd.f32 %v2316, %v2306
      %v2319 = vadd.f32 %v2316, %v2308
      %v2320 = vadd.f32 %v2316, %v2311
      %v2321 = vadd.f32 %v2316, %v2313
      %s2322 = scalar_lea.vmem %s8, 16
      %v2323 = vld [vmem:[%s2322] sm:$0xf]
      %v2324 = vld [vmem:[%s2322 + $0x4] sm:$0xf]
      %v2325 = vld [vmem:[%s2322 + $0x8] sm:$0xf]
      %v2326 = vld [vmem:[%s2322 + $0xc] sm:$0xf]
      %v2331 = vunpack.c.l.b16 %v2323
      %v2332 = vunpack.c.l.b16 %v2324
      %v2333 = vunpack.c.l.b16 %v2325
      %v2334 = vunpack.c.l.b16 %v2326
      %v2335 = vpack.c.b16 %v2332, %v2331
      %v2336 = vpack.c.b16 %v2334, %v2333
      %v2338 = vsel %vm2204, %v2335, 0
      %v2341 = vsel %vm2204, %v2336, 0
      %2343 = vmatpush.bf16.msra.mxu0 0
      %2344 = vmatpush.bf16.msra.mxu0 0
      %2345 = vmatpush.bf16.msra.mxu0 0
      %2346 = vmatpush.bf16.msra.mxu0 0
      %2347 = vmatpush.bf16.msra.mxu0 %v2188
      %2348 = vmatpush.bf16.msra.mxu0 %v2187
      %2349 = vmatpush.bf16.msra.mxu0 %v2186
      %2350 = vmatpush.bf16.msra.mxu0 %v2185
      %2351 = vmatmul.bf16.gmra.mxu0 %v2338
      %v2352 = vpop.f32.mrf.mxu0
      %v2353 = vadd.f32 0.0, %v2352
      %v2354 = vpop.f32.mrf.mxu0
      %v2355 = vadd.f32 0.0, %v2354
      %2356 = vmatmul.bf16.gmra.mxu0 %v2341
      %v2357 = vpop.f32.mrf.mxu0
      %v2358 = vadd.f32 0.0, %v2357
      %v2359 = vpop.f32.mrf.mxu0
      %v2360 = vadd.f32 0.0, %v2359
      %2361 = vdwg.mxu0
      %v2362 = vpack.c.bf16 %v2355, %v2353
      %v2363 = vpack.c.bf16 %v2360, %v2358
      %s2364 = scalar_lea.vmem %s7, 64
      %v2365 = vld [vmem:[%s2364] sm:$0xf]
      %v2366 = vld [vmem:[%s2364 + $0x4] sm:$0xf]
      %v2367 = vld [vmem:[%s2364 + $0x8] sm:$0xf]
      %v2368 = vld [vmem:[%s2364 + $0xc] sm:$0xf]
      %v2369 = vld [vmem:[%s2364 + $0x10] sm:$0xf]
      %v2370 = vld [vmem:[%s2364 + $0x14] sm:$0xf]
      %v2371 = vld [vmem:[%s2364 + $0x18] sm:$0xf]
      %v2372 = vld [vmem:[%s2364 + $0x1c] sm:$0xf]
      %v2373 = vld [vmem:[%s2364 + $0x20] sm:$0xf]
      %v2374 = vld [vmem:[%s2364 + $0x24] sm:$0xf]
      %v2375 = vld [vmem:[%s2364 + $0x28] sm:$0xf]
      %v2376 = vld [vmem:[%s2364 + $0x2c] sm:$0xf]
      %v2377 = vld [vmem:[%s2364 + $0x30] sm:$0xf]
      %v2378 = vld [vmem:[%s2364 + $0x34] sm:$0xf]
      %v2379 = vld [vmem:[%s2364 + $0x38] sm:$0xf]
      %v2380 = vld [vmem:[%s2364 + $0x3c] sm:$0xf]
      %v2397 = vunpack.c.l.b16 %v2365
      %v2398 = vunpack.c.l.b16 %v2366
      %v2399 = vunpack.c.l.b16 %v2367
      %v2400 = vunpack.c.l.b16 %v2368
      %v2401 = vunpack.c.l.b16 %v2369
      %v2402 = vunpack.c.l.b16 %v2370
      %v2403 = vunpack.c.l.b16 %v2371
      %v2404 = vunpack.c.l.b16 %v2372
      %v2405 = vunpack.c.l.b16 %v2373
      %v2406 = vunpack.c.l.b16 %v2374
      %v2407 = vunpack.c.l.b16 %v2375
      %v2408 = vunpack.c.l.b16 %v2376
      %v2409 = vunpack.c.l.b16 %v2377
      %v2410 = vunpack.c.l.b16 %v2378
      %v2411 = vunpack.c.l.b16 %v2379
      %v2412 = vunpack.c.l.b16 %v2380
      %v2413 = vpack.c.b16 %v2398, %v2397
      %v2414 = vpack.c.b16 %v2400, %v2399
      %v2415 = vpack.c.b16 %v2402, %v2401
      %v2416 = vpack.c.b16 %v2404, %v2403
      %v2417 = vpack.c.b16 %v2406, %v2405
      %v2418 = vpack.c.b16 %v2408, %v2407
      %v2419 = vpack.c.b16 %v2410, %v2409
      %v2420 = vpack.c.b16 %v2412, %v2411
      %2429 = vmatpush.bf16.msra.mxu0 %v2420
      %2430 = vmatpush.bf16.msra.mxu0 %v2419
      %2431 = vmatpush.bf16.msra.mxu0 %v2418
      %2432 = vmatpush.bf16.msra.mxu0 %v2417
      %2433 = vmatpush.bf16.msra.mxu0 %v2416
      %2434 = vmatpush.bf16.msra.mxu0 %v2415
      %2435 = vmatpush.bf16.msra.mxu0 %v2414
      %2436 = vmatpush.bf16.msra.mxu0 %v2413
      %2437 = vmatmul.bf16.gmra.mxu0 %v2362
      %v2438 = vpop.f32.mrf.mxu0
      %v2439 = vadd.f32 0.0, %v2438
      %v2440 = vpop.f32.mrf.mxu0
      %v2441 = vadd.f32 0.0, %v2440
      %2442 = vmatmul.bf16.gmra.mxu0 %v2363
      %v2443 = vpop.f32.mrf.mxu0
      %v2444 = vadd.f32 0.0, %v2443
      %v2445 = vpop.f32.mrf.mxu0
      %v2446 = vadd.f32 0.0, %v2445
      %2447 = vdwg.mxu0
      %v2448 = vadd.f32 %v2318, %v2439
      %v2449 = vadd.f32 %v2319, %v2441
      %v2450 = vadd.f32 %v2320, %v2444
      %v2451 = vadd.f32 %v2321, %v2446
      %s2452 = scalar_lea.vmem %s8, 32
      %v2453 = vld [vmem:[%s2452] sm:$0xf]
      %v2454 = vld [vmem:[%s2452 + $0x4] sm:$0xf]
      %v2455 = vld [vmem:[%s2452 + $0x8] sm:$0xf]
      %v2456 = vld [vmem:[%s2452 + $0xc] sm:$0xf]
      %v2461 = vunpack.c.l.b16 %v2453
      %v2462 = vunpack.c.l.b16 %v2454
      %v2463 = vunpack.c.l.b16 %v2455
      %v2464 = vunpack.c.l.b16 %v2456
      %v2465 = vpack.c.b16 %v2462, %v2461
      %v2466 = vpack.c.b16 %v2464, %v2463
      %v2468 = vsel %vm2204, %v2465, 0
      %v2471 = vsel %vm2204, %v2466, 0
      %2473 = vmatpush.bf16.msra.mxu0 0
      %2474 = vmatpush.bf16.msra.mxu0 0
      %2475 = vmatpush.bf16.msra.mxu0 0
      %2476 = vmatpush.bf16.msra.mxu0 0
      %2477 = vmatpush.bf16.msra.mxu0 %v2188
      %2478 = vmatpush.bf16.msra.mxu0 %v2187
      %2479 = vmatpush.bf16.msra.mxu0 %v2186
      %2480 = vmatpush.bf16.msra.mxu0 %v2185
      %2481 = vmatmul.bf16.gmra.mxu0 %v2468
      %v2482 = vpop.f32.mrf.mxu0
      %v2483 = vadd.f32 0.0, %v2482
      %v2484 = vpop.f32.mrf.mxu0
      %v2485 = vadd.f32 0.0, %v2484
      %2486 = vmatmul.bf16.gmra.mxu0 %v2471
      %v2487 = vpop.f32.mrf.mxu0
      %v2488 = vadd.f32 0.0, %v2487
      %v2489 = vpop.f32.mrf.mxu0
      %v2490 = vadd.f32 0.0, %v2489
      %2491 = vdwg.mxu0
      %v2492 = vpack.c.bf16 %v2485, %v2483
      %v2493 = vpack.c.bf16 %v2490, %v2488
      %s2494 = scalar_lea.vmem %s7, 128
      %v2495 = vld [vmem:[%s2494] sm:$0xf]
      %v2496 = vld [vmem:[%s2494 + $0x4] sm:$0xf]
      %v2497 = vld [vmem:[%s2494 + $0x8] sm:$0xf]
      %v2498 = vld [vmem:[%s2494 + $0xc] sm:$0xf]
      %v2499 = vld [vmem:[%s2494 + $0x10] sm:$0xf]
      %v2500 = vld [vmem:[%s2494 + $0x14] sm:$0xf]
      %v2501 = vld [vmem:[%s2494 + $0x18] sm:$0xf]
      %v2502 = vld [vmem:[%s2494 + $0x1c] sm:$0xf]
      %v2503 = vld [vmem:[%s2494 + $0x20] sm:$0xf]
      %v2504 = vld [vmem:[%s2494 + $0x24] sm:$0xf]
      %v2505 = vld [vmem:[%s2494 + $0x28] sm:$0xf]
      %v2506 = vld [vmem:[%s2494 + $0x2c] sm:$0xf]
      %v2507 = vld [vmem:[%s2494 + $0x30] sm:$0xf]
      %v2508 = vld [vmem:[%s2494 + $0x34] sm:$0xf]
      %v2509 = vld [vmem:[%s2494 + $0x38] sm:$0xf]
      %v2510 = vld [vmem:[%s2494 + $0x3c] sm:$0xf]
      %v2527 = vunpack.c.l.b16 %v2495
      %v2528 = vunpack.c.l.b16 %v2496
      %v2529 = vunpack.c.l.b16 %v2497
      %v2530 = vunpack.c.l.b16 %v2498
      %v2531 = vunpack.c.l.b16 %v2499
      %v2532 = vunpack.c.l.b16 %v2500
      %v2533 = vunpack.c.l.b16 %v2501
      %v2534 = vunpack.c.l.b16 %v2502
      %v2535 = vunpack.c.l.b16 %v2503
      %v2536 = vunpack.c.l.b16 %v2504
      %v2537 = vunpack.c.l.b16 %v2505
      %v2538 = vunpack.c.l.b16 %v2506
      %v2539 = vunpack.c.l.b16 %v2507
      %v2540 = vunpack.c.l.b16 %v2508
      %v2541 = vunpack.c.l.b16 %v2509
      %v2542 = vunpack.c.l.b16 %v2510
      %v2543 = vpack.c.b16 %v2528, %v2527
      %v2544 = vpack.c.b16 %v2530, %v2529
      %v2545 = vpack.c.b16 %v2532, %v2531
      %v2546 = vpack.c.b16 %v2534, %v2533
      %v2547 = vpack.c.b16 %v2536, %v2535
      %v2548 = vpack.c.b16 %v2538, %v2537
      %v2549 = vpack.c.b16 %v2540, %v2539
      %v2550 = vpack.c.b16 %v2542, %v2541
      %2559 = vmatpush.bf16.msra.mxu0 %v2550
      %2560 = vmatpush.bf16.msra.mxu0 %v2549
      %2561 = vmatpush.bf16.msra.mxu0 %v2548
      %2562 = vmatpush.bf16.msra.mxu0 %v2547
      %2563 = vmatpush.bf16.msra.mxu0 %v2546
      %2564 = vmatpush.bf16.msra.mxu0 %v2545
      %2565 = vmatpush.bf16.msra.mxu0 %v2544
      %2566 = vmatpush.bf16.msra.mxu0 %v2543
      %2567 = vmatmul.bf16.gmra.mxu0 %v2492
      %v2568 = vpop.f32.mrf.mxu0
      %v2569 = vadd.f32 0.0, %v2568
      %v2570 = vpop.f32.mrf.mxu0
      %v2571 = vadd.f32 0.0, %v2570
      %2572 = vmatmul.bf16.gmra.mxu0 %v2493
      %v2573 = vpop.f32.mrf.mxu0
      %v2574 = vadd.f32 0.0, %v2573
      %v2575 = vpop.f32.mrf.mxu0
      %v2576 = vadd.f32 0.0, %v2575
      %2577 = vdwg.mxu0
      %v2578 = vadd.f32 %v2448, %v2569
      %v2579 = vadd.f32 %v2449, %v2571
      %v2580 = vadd.f32 %v2450, %v2574
      %v2581 = vadd.f32 %v2451, %v2576
      %vm2582 = vcmp.gt.f32.partialorder %v2578, 0.0
      %vm2583 = vcmp.gt.f32.partialorder %v2579, 0.0
      %vm2584 = vcmp.gt.f32.partialorder %v2580, 0.0
      %vm2585 = vcmp.gt.f32.partialorder %v2581, 0.0
      %v2586 = vmul.f32 %v2578, 0.01
      %v2587 = vmul.f32 %v2579, 0.01
      %v2588 = vmul.f32 %v2580, 0.01
      %v2589 = vmul.f32 %v2581, 0.01
      %v2590 = vsel %vm2582, %v2578, %v2586
      %v2591 = vsel %vm2583, %v2579, %v2587
      %v2592 = vsel %vm2584, %v2580, %v2588
      %v2593 = vsel %vm2585, %v2581, %v2589
      %v2594 = vld [vmem:[%s10] sm:$0xff]
      %v2595 = vld [vmem:[%s10 + $0x8] sm:$0xff]
      %v2596 = vld [vmem:[%s10 + $0x10] sm:$0xff]
      %v2597 = vld [vmem:[%s10 + $0x18] sm:$0xff]
      %v2598 = vmul.f32 %v2590, %v2594
      %v2599 = vmul.f32 %v2591, %v2595
      %v2600 = vmul.f32 %v2592, %v2596
      %v2601 = vmul.f32 %v2593, %v2597
      %2602 = vadd.xlane.f32.xlu0 %v2598
      %v2603 = vpop.xlane.xlu0 %2602
      %2604 = vadd.xlane.f32.xlu0 %v2599
      %v2605 = vpop.xlane.xlu0 %2604
      %2606 = vadd.xlane.f32.xlu0 %v2600
      %v2607 = vpop.xlane.xlu0 %2606
      %2608 = vadd.xlane.f32.xlu0 %v2601
      %v2609 = vpop.xlane.xlu0 %2608
      %v2610 = vld [vmem:[%s11] sm:$0xff]
      %v2611 = vld [vmem:[%s11 + $0x8] sm:$0xff]
      %v2612 = vld [vmem:[%s11 + $0x10] sm:$0xff]
      %v2613 = vld [vmem:[%s11 + $0x18] sm:$0xff]
      %v2614 = vmul.f32 %v2603, %v2610
      %v2615 = vmul.f32 %v2605, %v2611
      %v2616 = vmul.f32 %v2607, %v2612
      %v2617 = vmul.f32 %v2609, %v2613
      %vm2618 = vcmask 64512
      %v2619 = vsel %vm2618, %v2614, 0.0
      %v2620 = vsel %vm2618, %v2615, 0.0
      %v2621 = vadd.f32 %v2619, %v2620
      %v2622 = vsel %vm2618, %v2616, 0.0
      %v2623 = vadd.f32 %v2621, %v2622
      %v2624 = vsel %vm2618, %v2617, 0.0
      %v2625 = vadd.f32 %v2623, %v2624
      %v2626 = vrot.slane %v2625, 4
      %v2627 = vadd.f32 %v2625, %v2626
      %v2628 = vrot.slane %v2627, 2
      %v2629 = vadd.f32 %v2627, %v2628
      %v2630 = vrot.slane %v2629, 1
      %v2631 = vadd.f32 %v2629, %v2630
      %v2632 = vld [vmem:[#allocation2] sm:$0x1]
      %2634 = vset.pattern.permute.xlu0 0
      %2635 = vperm.xlu0 %2634, %v2632
      %v2636 = vpop.permute.xlu0 %2635
      %v2638 = vperm.slane %v2636, 0
      %v2639 = vadd.f32 %v2631, %v2638
      %vm2640 = vcmask 57344
      %2641 = vst.msk [vmem:[%s443] sm:$0x1] %vm2640, %v2639
      %p2642 = scmp.lt.s32.totalorder %s26, 1
      %s2643 = scalar_select %p2642, %s26, 1
      %s2644 = scalar_lea.vmem %s13, %s2643
      // Predicated region
      $region73: #{discriminator_forward.1} parent=71 // pred_check
        %p2645 = pneg %p322
      $region74: #{discriminator_forward.1} parent=71 // pred_check_branch
        %2647 = sbr.rel (%p2645) target = $region76
      $region75: #{discriminator_forward.1} parent=71 // pred_region
        _
      $region76: #{discriminator_forward.1} parent=71 // pred_fallthru
        _
    $region72: #{discriminator_forward.1} parent=5 // pred_fallthru
      _
    %p2648 = scmp.le.s32.totalorder 2, %s21
    // Predicated region
    $region77: #{discriminator_forward.1} parent=5 // pred_check
      %p2649 = pneg %p2648
    $region78: #{discriminator_forward.1} parent=5 // pred_check_branch
      %2651 = sbr.rel (%p2649) target = $region80
    $region79: #{discriminator_forward.1} parent=5 // pred_region
      %s2652 = ssub.s32 %s21, 2
      // Predicated region
      $region81: #{discriminator_forward.1} parent=79 // pred_check
        %p2653 = pneg %p328
      $region82: #{discriminator_forward.1} parent=79 // pred_check_branch
        %2655 = sbr.rel (%p2653) target = $region84
      $region83: #{discriminator_forward.1} parent=79 // pred_region
        %p2656 = scmp.lt.s32.totalorder %s27, 1
        %s2657 = scalar_select %p2656, %s27, 1
        %s2658 = scalar_lea.vmem %s13, %s2657
      $region84: #{discriminator_forward.1} parent=79 // pred_fallthru
        _
    $region80: #{discriminator_forward.1} parent=5 // pred_fallthru
      _
  $region6: #{discriminator_forward.1} parent=0 // loop_footer
    %s25 = sadd.s32 1, %s21
  $region7: #{discriminator_forward.1} parent=0 // loop_footer_branch
    %20 = sbr.rel target = $region3
  $region8: #{discriminator_forward.1} parent=0 // loop_exit
    _

</llo_original>
